<compile_context>
chip_gen: v7x
topology: tpu7x:2x2x1
jax: 0.10.0
libtpu: 0.0.40
codegen_flags: <defaults>
</compile_context>

<pallas_src>
import functools
from typing import NamedTuple

import jax
import jax.numpy as jnp
from jax.experimental import pallas as pl
from jax.experimental.pallas import tpu as pltpu

_TQ_CANDIDATES = (1024, 512, 256, 128, 64, 32, 16, 8)
_TK_CANDIDATES = (2048, 1024, 512, 256, 128)
_SMALL_ROWS = 1024  # B*Lq at/below this -> single-grid-step fast path (if it fits VMEM)


def _round_up(x, m):
    return (x + m - 1) // m * m


def _vmem_budget():
    """Generation-aware scoped-VMEM budget (~75% of physical); 48 MiB v7x-safe fallback."""
    try:
        cap = int(getattr(pltpu.get_tpu_info(), "vmem_capacity_bytes", 0) or 0)
        if cap > 0:
            return (cap * 3) // 4
    except Exception:
        pass
    return 48 * 1024 * 1024


class _Plan(NamedTuple):
    path: str          # 'resident' | 'tiled'
    nb: int            # batch block (resident path; == B for the small-problem path)
    tq: int
    tk: int            # 0 for the resident path
    lq_pad: int
    lk_pad: int
    mask_mode: str     # 'none' | 'row' | 'full'
    return_attn: bool
    vmem_limit: int


# --------------------------------------------------------------------------------------
# Kernel bodies
# --------------------------------------------------------------------------------------
def _make_resident_kernel(masked, return_attn):
    """Softmax over the full (resident) Lk extent; one grid step per (batch, Lq tile)."""
    def kernel(*refs):
        n_in = 4 if masked else 3
        qw_ref, k_ref, v_ref = refs[0], refs[1], refs[2]
        mask_ref = refs[3] if masked else None
        outs = refs[n_in:]
        out_ref = outs[0]
        attn_ref = outs[1] if return_attn else None

        qw = qw_ref[...]                      # (NB, TQ, Dk)
        k = k_ref[...]                        # (NB, Lk, Dk)
        v = v_ref[...]                        # (NB, Lk, Dv)
        # qw @ k^T by contracting the minor dims (no transpose materialized), f32 acc.
        s = jnp.einsum("bqd,bkd->bqk", qw, k,
                       preferred_element_type=jnp.float32)         # (NB, TQ, Lk)
        if masked:
            s = jnp.where(mask_ref[...] != 0, -jnp.inf, s)
        m = jnp.max(s, axis=-1, keepdims=True)
        e = jnp.exp(s - m)
        inv = 1.0 / jnp.sum(e, axis=-1, keepdims=True)             # exact reciprocal
        # TODO(synk): dropout_rate > 0 would need pltpu.prng_* here; rate=0.0 is identity.
        if return_attn:
            p = e * inv
            attn_ref[...] = p.astype(attn_ref.dtype)
            pv = jnp.einsum("bqk,bkd->bqd", p.astype(v.dtype), v,
                            preferred_element_type=jnp.float32)
            out_ref[...] = pv.astype(out_ref.dtype)
        else:
            # attn writeback skipped: scale the small (TQ,Dv) result, not (TQ,Lk) probs.
            pv = jnp.einsum("bqk,bkd->bqd", e.astype(v.dtype), v,
                            preferred_element_type=jnp.float32)
            out_ref[...] = (pv * inv).astype(out_ref.dtype)
    return kernel


def _make_tiled_kernel(masked, return_attn, nk):
    """Two-pass flash-style kernel over KV tiles: phase 0 builds the running max/sum in
    VMEM scratch, phase 1 re-streams KV, writes normalized attn tiles and accumulates PV."""
    def kernel(*refs):
        n_in = 4 if masked else 3
        qw_ref, k_ref, v_ref = refs[0], refs[1], refs[2]
        mask_ref = refs[3] if masked else None
        rest = refs[n_in:]
        if return_attn:
            out_ref, attn_ref, m_sc, l_sc, acc_sc = rest
        else:
            out_ref, m_sc, l_sc, acc_sc = rest
            attn_ref = None
        j = pl.program_id(2)

        @pl.when(j == 0)
        def _():
            m_sc[...] = jnp.full(m_sc.shape, -jnp.inf, m_sc.dtype)
            l_sc[...] = jnp.zeros(l_sc.shape, l_sc.dtype)
            acc_sc[...] = jnp.zeros(acc_sc.shape, acc_sc.dtype)

        s = jnp.einsum("bqd,bkd->bqk", qw_ref[...], k_ref[...],
                       preferred_element_type=jnp.float32)          # (1, TQ, TK)
        if masked:
            s = jnp.where(mask_ref[...] != 0, -jnp.inf, s)

        @pl.when(j < nk)                      # phase 0: online max / rescaled sum
        def _():
            m_prev = m_sc[...]
            m_new = jnp.maximum(m_prev, jnp.max(s, axis=-1, keepdims=True))
            finite = m_new != -jnp.inf        # guard exp(nan) for fully-masked-so-far rows
            alpha = jnp.where(finite, jnp.exp(m_prev - m_new), 0.0)
            e = jnp.where(finite, jnp.exp(s - m_new), 0.0)
            l_sc[...] = alpha * l_sc[...] + jnp.sum(e, axis=-1, keepdims=True)
            m_sc[...] = m_new

        @pl.when(j >= nk)                     # phase 1: normalize, emit attn, accumulate PV
        def _():
            e = jnp.exp(s - m_sc[...])
            inv = 1.0 / l_sc[...]             # exact; fully-masked rows -> NaN like PyTorch
            if return_attn:
                p = e * inv
                attn_ref[...] = p.astype(attn_ref.dtype)
                acc_sc[...] += jnp.einsum("bqk,bkd->bqd", p.astype(v_ref.dtype), v_ref[...],
                                          preferred_element_type=jnp.float32)
            else:
                acc_sc[...] += jnp.einsum("bqk,bkd->bqd", e.astype(v_ref.dtype), v_ref[...],
                                          preferred_element_type=jnp.float32)

        @pl.when(j == 2 * nk - 1)
        def _():
            acc = acc_sc[...]
            if not return_attn:
                acc = acc * (1.0 / l_sc[...])
            out_ref[...] = acc.astype(out_ref.dtype)
    return kernel


# --------------------------------------------------------------------------------------
# Planning (pure Python on static shapes)
# --------------------------------------------------------------------------------------
def _resident_bytes(nb, tq, lk, dk, dv, isz, osz, mask_mode, return_attn):
    b = 2 * nb * tq * dk * isz                      # qw tile, double-buffered
    b += nb * lk * (dk + dv) * isz                  # k & v, single-buffered (pl.Buffered(1))
    b += 2 * nb * tq * dv * osz                     # out tile
    if return_attn:
        b += 2 * nb * tq * lk * osz                 # attn tile
    if mask_mode == "row":
        b += 2 * nb * lk
    elif mask_mode == "full":
        b += 2 * nb * tq * lk
    b += 3 * 4 * nb * tq * lk + 4 * nb * tq * dv    # f32 intermediates
    return b


def _tiled_bytes(tq, tk, dk, dv, isz, osz, mask_mode, return_attn):
    b = 2 * tq * dk * isz + 2 * tk * (dk + dv) * isz
    b += 2 * tq * dv * osz
    if return_attn:
        b += 2 * tq * tk * osz
    if mask_mode == "row":
        b += 2 * tk
    elif mask_mode == "full":
        b += 2 * tq * tk
    b += 3 * 4 * tq * tk + 4 * tq * dv              # f32 intermediates
    b += 4 * tq * (2 + dv)                          # m/l/acc scratch
    return b


def _make_plan(B, Lq, Lk, Dk, Dv, in_dtype, out_dtype, mask_mode, return_attn, force=None):
    budget = _vmem_budget()
    isz = jnp.dtype(in_dtype).itemsize
    osz = jnp.dtype(out_dtype).itemsize
    lq8 = _round_up(Lq, 8)
    force = force or {}
    path = force.get("path")

    if path != "tiled":
        # Small-problem fast path: the whole problem in a single grid step.
        if (B * lq8 <= _SMALL_ROWS and
                _resident_bytes(B, lq8, Lk, Dk, Dv, isz, osz, mask_mode,
                                return_attn) <= budget):
            return _Plan("resident", B, lq8, 0, lq8, Lk, mask_mode, return_attn, budget)
        # Resident-KV path, tiled over Lq.
        best = None
        for tq in _TQ_CANDIDATES:
            if tq > lq8:
                continue
            if _resident_bytes(1, tq, Lk, Dk, Dv, isz, osz, mask_mode,
                               return_attn) <= budget:
                best = tq
                break
        if best is not None and (path == "resident" or best >= min(128, lq8)):
            return _Plan("resident", 1, best, 0, _round_up(Lq, best), Lk,
                         mask_mode, return_attn, budget)

    # KV-tiled two-pass path: bounded VMEM for long Lk.
    mm = mask_mode
    tq_force, tk_force = force.get("tq"), force.get("tk")
    for tq in ((tq_force,) if tq_force else _TQ_CANDIDATES):
        if tq > lq8:
            continue
        fits = []
        for tk in ((tk_force,) if tk_force else _TK_CANDIDATES):
            if tk > _round_up(Lk, 128):
                continue
            if _tiled_bytes(tq, tk, Dk, Dv, isz, osz, mm, return_attn) <= budget:
                fits.append(tk)
        if fits:
            tk = min(fits, key=lambda t: (_round_up(Lk, t), -t))   # least Lk padding
            lk_pad = _round_up(Lk, tk)
            if lk_pad != Lk and mm == "none":
                mm = "row"          # synthesize a padding mask for the padded K columns
            return _Plan("tiled", 1, tq, tk, _round_up(Lq, tq), lk_pad, mm,
                         return_attn, budget)
    raise ValueError(
        "GeneralAttention problem does not fit the available VMEM budget "
        f"({budget} bytes) even with the smallest tile configuration.")


# --------------------------------------------------------------------------------------
# pallas_call construction
# --------------------------------------------------------------------------------------
def _build_call(plan, B, Dk, Dv, out_dtype, in_itemsize):
    masked = plan.mask_mode != "none"
    ra = plan.return_attn
    Lq, Lk = plan.lq_pad, plan.lk_pad
    osz = jnp.dtype(out_dtype).itemsize

    out_shape = [jax.ShapeDtypeStruct((B, Lq, Dv), out_dtype)]
    if ra:
        out_shape.append(jax.ShapeDtypeStruct((B, Lq, Lk), out_dtype))

    if plan.path == "resident":
        nb, tq = plan.nb, plan.tq
        grid = (B // nb, Lq // tq)
        in_specs = [
            pl.BlockSpec((nb, tq, Dk), lambda b, i: (b, i, 0)),
            # k/v blocks never change along the inner (Lq) grid axis -> single buffer.
            pl.BlockSpec((nb, Lk, Dk), lambda b, i: (b, 0, 0),
                         pipeline_mode=pl.Buffered(1)),
            pl.BlockSpec((nb, Lk, Dv), lambda b, i: (b, 0, 0),
                         pipeline_mode=pl.Buffered(1)),
        ]
        if plan.mask_mode == "row":
            in_specs.append(pl.BlockSpec((nb, 1, Lk), lambda b, i: (b, 0, 0)))
        elif plan.mask_mode == "full":
            in_specs.append(pl.BlockSpec((nb, tq, Lk), lambda b, i: (b, i, 0)))
        out_specs = [pl.BlockSpec((nb, tq, Dv), lambda b, i: (b, i, 0))]
        if ra:
            out_specs.append(pl.BlockSpec((nb, tq, Lk), lambda b, i: (b, i, 0)))
        kernel = _make_resident_kernel(masked, ra)
        scratch = []
        dims = ("parallel", "parallel")
        kv_passes = 1
    else:
        tq, tk = plan.tq, plan.tk
        nk = Lk // tk
        grid = (B, Lq // tq, 2 * nk)
        in_specs = [
            pl.BlockSpec((1, tq, Dk), lambda b, i, j: (b, i, 0)),
            pl.BlockSpec((1, tk, Dk), lambda b, i, j: (b, j % nk, 0)),
            pl.BlockSpec((1, tk, Dv), lambda b, i, j: (b, j % nk, 0)),
        ]
        if plan.mask_mode == "row":
            in_specs.append(pl.BlockSpec((1, 1, tk), lambda b, i, j: (b, 0, j % nk)))
        elif plan.mask_mode == "full":
            in_specs.append(pl.BlockSpec((1, tq, tk), lambda b, i, j: (b, i, j % nk)))
        out_specs = [pl.BlockSpec((1, tq, Dv), lambda b, i, j: (b, i, 0))]
        if ra:
            out_specs.append(pl.BlockSpec(
                (1, tq, tk), lambda b, i, j: (b, i, jnp.maximum(j - nk, 0))))
        kernel = _make_tiled_kernel(masked, ra, nk)
        scratch = [pltpu.VMEM((1, tq, 1), jnp.float32),    # running max
                   pltpu.VMEM((1, tq, 1), jnp.float32),    # running sum
                   pltpu.VMEM((1, tq, Dv), jnp.float32)]   # PV accumulator
        dims = ("parallel", "parallel", "arbitrary")
        kv_passes = 2

    flops = 2 * B * Lq * Lk * (Dk * kv_passes + Dv)
    transcendentals = B * Lq * Lk * kv_passes
    bytes_acc = (B * Lq * Dk + kv_passes * B * Lk * (Dk + Dv)) * in_itemsize
    bytes_acc += B * Lq * Dv * osz
    if ra:
        bytes_acc += B * Lq * Lk * osz
    if plan.mask_mode == "row":
        bytes_acc += B * Lk
    elif plan.mask_mode == "full":
        bytes_acc += B * Lq * Lk

    return pl.pallas_call(
        kernel,
        out_shape=tuple(out_shape) if ra else out_shape[0],
        grid=grid,
        in_specs=in_specs,
        out_specs=tuple(out_specs) if ra else out_specs[0],
        scratch_shapes=scratch,
        compiler_params=pltpu.CompilerParams(
            dimension_semantics=dims, vmem_limit_bytes=plan.vmem_limit),
        cost_estimate=pl.CostEstimate(flops=flops, transcendentals=transcendentals,
                                      bytes_accessed=bytes_acc),
    )


# --------------------------------------------------------------------------------------
# Wrapper
# --------------------------------------------------------------------------------------
@functools.partial(jax.jit, static_argnames=("plan",))
def _general_attention_impl(q, k, v, weight, mask, plan):
    B, Lq, _ = q.shape
    _, Lk, Dk = k.shape
    Dv = v.shape[-1]
    # Hoisted projection: q @ W stays in XLA (tiny contraction, would waste the MXU).
    qw = jnp.einsum("bqd,dk->bqk", q, weight,
                    preferred_element_type=jnp.float32).astype(k.dtype)
    if plan.lq_pad != Lq:
        qw = jnp.pad(qw, ((0, 0), (0, plan.lq_pad - Lq), (0, 0)))
    if plan.lk_pad != Lk:
        pad_k = plan.lk_pad - Lk
        k = jnp.pad(k, ((0, 0), (0, pad_k), (0, 0)))
        v = jnp.pad(v, ((0, 0), (0, pad_k), (0, 0)))

    args = [qw, k, v]
    if plan.mask_mode != "none":
        if mask is None:
            m = jnp.zeros((B, 1, Lk), dtype=jnp.bool_)
        else:
            m = jnp.asarray(mask) != 0
            if m.ndim < 3:
                m = m.reshape((1,) * (3 - m.ndim) + m.shape)
        if plan.mask_mode == "row":
            m = jnp.broadcast_to(m, (B, 1, Lk))          # shipped UN-broadcast over Lq
        else:
            m = jnp.broadcast_to(m, (B, Lq, Lk))
            if plan.lq_pad != Lq:
                m = jnp.pad(m, ((0, 0), (0, plan.lq_pad - Lq), (0, 0)))
        if plan.lk_pad != Lk:
            m = jnp.pad(m, ((0, 0), (0, 0), (0, plan.lk_pad - Lk)), constant_values=True)
        args.append(m.astype(jnp.int8))

    call = _build_call(plan, B, Dk, Dv, q.dtype, jnp.dtype(k.dtype).itemsize)
    res = call(*args)
    if plan.return_attn:
        out, attn = res
        return out[:, :Lq, :], attn[:, :Lq, :Lk]
    return res[:, :Lq, :]


def general_attention(q, k, v, weight, attention_mask=None, return_attention=True,
                      _force=None):
    """Matches GeneralAttention.forward: returns (output, soft_attention)
    (or just `output` when return_attention=False)."""
    q, k, v, weight = map(jnp.asarray, (q, k, v, weight))
    B, Lq, _ = q.shape
    _, Lk, Dk = k.shape
    Dv = v.shape[-1]
    if attention_mask is None:
        mask_mode, mask = "none", None
    else:
        mask = jnp.asarray(attention_mask)
        mshape = (1,) * (3 - mask.ndim) + mask.shape if mask.ndim < 3 else mask.shape
        mask_mode = "row" if mshape[-2] == 1 else "full"
    plan = _make_plan(B, Lq, Lk, Dk, Dv, k.dtype, q.dtype, mask_mode,
                      bool(return_attention), _force)
    return _general_attention_impl(q, k, v, weight, mask, plan=plan)


def xavier_uniform(key, q_dim, k_dim, dtype=jnp.float32):
    # Matches nn.init.xavier_uniform_ for a (q_dim, k_dim) matrix.
    bound = (6.0 / (q_dim + k_dim)) ** 0.5
    return jax.random.uniform(key, (q_dim, k_dim), dtype=dtype,
                              minval=-bound, maxval=bound)


if __name__ == "__main__":
    # Use full-f32 matmuls so the XLA reference and the in-kernel MXU dots agree tightly.
    jax.config.update("jax_default_matmul_precision", "highest")

    key = jax.random.PRNGKey(0)
    kq, kk, kv_, kw, kq2, kk2, kv2 = jax.random.split(key, 7)

    B, Lq, Lk = 2, 8, 8
    q_dim, k_dim, v_dim = 32, 32, 32

    q = jax.random.normal(kq, (B, Lq, q_dim), dtype=jnp.float32)
    k = jax.random.normal(kk, (B, Lk, k_dim), dtype=jnp.float32)
    v = jax.random.normal(kv_, (B, Lk, v_dim), dtype=jnp.float32)
    weight = xavier_uniform(kw, q_dim, k_dim)

    def reference(q_, k_, v_, w_, mask_=None):
        s = jnp.einsum("bqd,dk,blk->bql", q_, w_, k_)
        if mask_ is not None:
            s = jnp.where(jnp.broadcast_to(mask_, s.shape), -jnp.inf, s)
        p = jax.nn.softmax(s, axis=-1)
        return jnp.einsum("bql,blv->bqv", p, v_), p

    # 1) no-mask, small-problem fast path (single grid step, both batches resident)
    out, attn = general_attention(q, k, v, weight)
    jax.block_until_ready((out, attn))
    r_out, r_attn = reference(q, k, v, weight)
    assert out.shape == (B, Lq, v_dim) and attn.shape == (B, Lq, Lk)
    assert jnp.allclose(out, r_out, atol=2e-3, rtol=2e-3)
    assert jnp.allclose(attn, r_attn, atol=2e-3, rtol=2e-3)

    # 2) broadcastable (B,1,Lk) padding mask: shipped un-broadcast (row-mask path)
    pad_mask = jnp.zeros((B, 1, Lk), dtype=jnp.bool_).at[:, :, -2:].set(True)
    out_m, attn_m = general_attention(q, k, v, weight, attention_mask=pad_mask)
    jax.block_until_ready((out_m, attn_m))
    r_out_m, r_attn_m = reference(q, k, v, weight, pad_mask)
    assert jnp.allclose(out_m, r_out_m, atol=2e-3, rtol=2e-3)
    assert jnp.allclose(attn_m, r_attn_m, atol=2e-3, rtol=2e-3)

    # 3) output-only variant: the (B,Lq,Lk) attn writeback is skipped entirely
    out_only = general_attention(q, k, v, weight, attention_mask=pad_mask,
                                 return_attention=False)
    jax.block_until_ready(out_only)
    assert out_only.shape == (B, Lq, v_dim)
    assert jnp.allclose(out_only, r_out_m, atol=2e-3, rtol=2e-3)

    # 4) KV-tiled two-pass (flash-style) path, forced so it is exercised at small scale
    B2, Lq2, Lk2 = 2, 16, 256
    q2 = jax.random.normal(kq2, (B2, Lq2, q_dim), dtype=jnp.float32)
    k2 = jax.random.normal(kk2, (B2, Lk2, k_dim), dtype=jnp.float32)
    v2 = jax.random.normal(kv2, (B2, Lk2, v_dim), dtype=jnp.float32)
    pad_mask2 = jnp.zeros((B2, 1, Lk2), dtype=jnp.bool_).at[:, :, -5:].set(True)
    out2, attn2 = general_attention(q2, k2, v2, weight, attention_mask=pad_mask2,
                                    _force={"path": "tiled", "tq": 16, "tk": 128})
    jax.block_until_ready((out2, attn2))
    r_out2, r_attn2 = reference(q2, k2, v2, weight, pad_mask2)
    assert jnp.allclose(out2, r_out2, atol=2e-3, rtol=2e-3)
    assert jnp.allclose(attn2, r_attn2, atol=2e-3, rtol=2e-3)

    print("KERNEL_OK")
</pallas_src>

<mosaic_0001>
module attributes {stable_mosaic.version = 11 : i64} {
  func.func @kernel(%arg0: i32, %arg1: i32, %arg2: memref<2x8x32xf32, #tpu.memory_space<vmem>>, %arg3: memref<2x8x32xf32, #tpu.memory_space<vmem>>, %arg4: memref<2x8x32xf32, #tpu.memory_space<vmem>>, %arg5: memref<2x8x32xf32, #tpu.memory_space<vmem>>, %arg6: memref<2x8x8xf32, #tpu.memory_space<vmem>>) attributes {dimension_semantics = [#tpu.dimension_semantics<parallel>, #tpu.dimension_semantics<parallel>], iteration_bounds = array<i64: 1, 1>, scalar_prefetch = 0 : i64, scratch_operands = 0 : i64, tpu.core_type = #tpu.core_type<tc>, window_params = [{transform_indices = @transform_0, window_bounds = array<i64: 2, 8, 32>}, {pipeline_mode = #tpu.pipeline_mode<synchronous>, transform_indices = @transform_1, window_bounds = array<i64: 2, 8, 32>}, {pipeline_mode = #tpu.pipeline_mode<synchronous>, transform_indices = @transform_2, window_bounds = array<i64: 2, 8, 32>}, {transform_indices = @transform_3, window_bounds = array<i64: 2, 8, 32>}, {transform_indices = @transform_4, window_bounds = array<i64: 2, 8, 8>}]} {
    %c0 = arith.constant 0 : index
    %c0_0 = arith.constant 0 : index
    %c0_1 = arith.constant 0 : index
    %0 = vector.load %arg2[%c0, %c0_0, %c0_1] : memref<2x8x32xf32, #tpu.memory_space<vmem>>, vector<2x8x32xf32>
    %c0_2 = arith.constant 0 : index
    %c0_3 = arith.constant 0 : index
    %c0_4 = arith.constant 0 : index
    %1 = vector.load %arg3[%c0_2, %c0_3, %c0_4] : memref<2x8x32xf32, #tpu.memory_space<vmem>>, vector<2x8x32xf32>
    %c0_5 = arith.constant 0 : index
    %c0_6 = arith.constant 0 : index
    %c0_7 = arith.constant 0 : index
    %2 = vector.load %arg4[%c0_5, %c0_6, %c0_7] : memref<2x8x32xf32, #tpu.memory_space<vmem>>, vector<2x8x32xf32>
    "tpu.trace_start"() <{level = 10 : i32, message = "bqd,bkd->bqk"}> : () -> ()
    %cst = arith.constant dense<0.000000e+00> : vector<2x8x8xf32>
    %3 = tpu.matmul %0, %1, %cst {dimension_numbers = #tpu.dot_dimension_numbers<[2], [2], [1], [1], [0, 0, 0, 1, 1, 1], [0], [0]>, precision = #tpu.contract_precision<fp32>} : vector<2x8x32xf32>, vector<2x8x32xf32>, vector<2x8x8xf32> -> vector<2x8x8xf32>
    "tpu.trace_stop"() : () -> ()
    %cst_8 = arith.constant dense<0xFF800000> : vector<2x8xf32>
    %4 = vector.multi_reduction <maximumf>, %3, %cst_8 [2] : vector<2x8x8xf32> to vector<2x8xf32>
    %5 = vector.shape_cast %4 : vector<2x8xf32> to vector<2x8x1xf32>
    %6 = vector.broadcast %5 : vector<2x8x1xf32> to vector<2x8x8xf32>
    %7 = arith.subf %3, %6 : vector<2x8x8xf32>
    %8 = math.exp %7 : vector<2x8x8xf32>
    %cst_9 = arith.constant dense<0.000000e+00> : vector<2x8xf32>
    %9 = vector.multi_reduction <add>, %8, %cst_9 [2] : vector<2x8x8xf32> to vector<2x8xf32>
    %10 = vector.shape_cast %9 : vector<2x8xf32> to vector<2x8x1xf32>
    %cst_10 = arith.constant 1.000000e+00 : f32
    %11 = vector.broadcast %cst_10 : f32 to vector<2x8x1xf32>
    %12 = arith.divf %11, %10 : vector<2x8x1xf32>
    %13 = vector.broadcast %12 : vector<2x8x1xf32> to vector<2x8x8xf32>
    %14 = arith.mulf %8, %13 : vector<2x8x8xf32>
    %c0_11 = arith.constant 0 : index
    %c0_12 = arith.constant 0 : index
    %c0_13 = arith.constant 0 : index
    %15 = vector.load %arg6[%c0_11, %c0_12, %c0_13] : memref<2x8x8xf32, #tpu.memory_space<vmem>>, vector<2x8x8xf32>
    tpu.vector_store %arg6[%c0_11, %c0_12, %c0_13], %14 {strides = array<i32>} : memref<2x8x8xf32, #tpu.memory_space<vmem>>, vector<2x8x8xf32>,
    "tpu.trace_start"() <{level = 10 : i32, message = "bqk,bkd->bqd"}> : () -> ()
    %cst_14 = arith.constant dense<0.000000e+00> : vector<2x8x32xf32>
    %16 = tpu.matmul %14, %2, %cst_14 {dimension_numbers = #tpu.dot_dimension_numbers<[2], [1], [1], [2], [0, 0, 0, 1, 1, 2], [0], [0]>, precision = #tpu.contract_precision<fp32>} : vector<2x8x8xf32>, vector<2x8x32xf32>, vector<2x8x32xf32> -> vector<2x8x32xf32>
    "tpu.trace_stop"() : () -> ()
    %c0_15 = arith.constant 0 : index
    %c0_16 = arith.constant 0 : index
    %c0_17 = arith.constant 0 : index
    %17 = vector.load %arg5[%c0_15, %c0_16, %c0_17] : memref<2x8x32xf32, #tpu.memory_space<vmem>>, vector<2x8x32xf32>
    tpu.vector_store %arg5[%c0_15, %c0_16, %c0_17], %16 {strides = array<i32>} : memref<2x8x32xf32, #tpu.memory_space<vmem>>, vector<2x8x32xf32>,
    return
  }
  func.func @transform_0(%arg0: i32, %arg1: i32) -> (i32, i32, i32) {
    %c0_i32 = arith.constant 0 : i32
    %c0_i32_0 = arith.constant 0 : i32
    return %arg0, %arg1, %c0_i32 : i32, i32, i32
  }
  func.func @transform_1(%arg0: i32, %arg1: i32) -> (i32, i32, i32) {
    %c0_i32 = arith.constant 0 : i32
    %c0_i32_0 = arith.constant 0 : i32
    %c0_i32_1 = arith.constant 0 : i32
    return %arg0, %c0_i32, %c0_i32_0 : i32, i32, i32
  }
  func.func @transform_2(%arg0: i32, %arg1: i32) -> (i32, i32, i32) {
    %c0_i32 = arith.constant 0 : i32
    %c0_i32_0 = arith.constant 0 : i32
    %c0_i32_1 = arith.constant 0 : i32
    return %arg0, %c0_i32, %c0_i32_0 : i32, i32, i32
  }
  func.func @transform_3(%arg0: i32, %arg1: i32) -> (i32, i32, i32) {
    %c0_i32 = arith.constant 0 : i32
    %c0_i32_0 = arith.constant 0 : i32
    return %arg0, %arg1, %c0_i32 : i32, i32, i32
  }
  func.func @transform_4(%arg0: i32, %arg1: i32) -> (i32, i32, i32) {
    %c0_i32 = arith.constant 0 : i32
    %c0_i32_0 = arith.constant 0 : i32
    return %arg0, %arg1, %c0_i32 : i32, i32, i32
  }
}

</mosaic_0001>

<llo_original>
// kernel: _general_attention_impl.1
$region0: #{_general_attention_impl.1}
  #allocation0 [shape = 'u32[]', space=smem, size = 0x4, offset = 0x4, fixed_abs, tag = 'smem constant byte address 0x4 - core index']
  #allocation1 [shape = 'u32[144,128]{1,0:T(1,128)}', space=vmem, size = 0x12000, scoped, tag = 'internal scratch']
  %s0 = inlined_call_operand.vmem [shape: f32[2,8,32], index: 0, kind: input, shape index: {}]
  %s1 = inlined_call_operand.vmem [shape: f32[2,8,32], index: 1, kind: input, shape index: {}]
  %s2 = inlined_call_operand.vmem [shape: f32[2,8,32], index: 2, kind: input, shape index: {}]
  %s3 = inlined_call_operand.hbm [shape: f32[2,8,32], index: 3, kind: output, shape index: {0}]
  %s4 = inlined_call_operand.hbm [shape: f32[2,8,8], index: 4, kind: output, shape index: {1}]
  %5 = xla_tuple %s3, %s4
  %s6 = sld [smem:[#allocation0]]
  $region30: #{_general_attention_impl.1} parent=0
    _
  %s8 = ssub.s32 1, %s6
  %s9 = scalar_select 0, %s8, %s6
  $region1: #{_general_attention_impl.1} parent=0
    #allocation2 [shape = 'u8[8192]{0}', space=vmem, size = 0x2000, scoped, tag = 'output window, operand 0, single buffered']
    #allocation3 [shape = 's32[1]{0}', space=sflag, size = 0x4, scoped, tag = 'scoped memory for _general_attention_impl.1']
    #allocation4 [shape = 'u8[8192]{0}', space=vmem, size = 0x2000, scoped, tag = 'output window, operand 1, single buffered']
    #allocation5 [shape = 's32[1]{0}', space=sflag, size = 0x4, scoped, tag = 'scoped memory for _general_attention_impl.1']
    %10 = vsyncpa [#allocation3], 0
    %11 = vsyncpa [#allocation5], 0
    // Predicated region
    $region2: #{_general_attention_impl.1} parent=1 // pred_check
      _
    $region3: #{_general_attention_impl.1} parent=1 // pred_check_branch
      %13 = sbr.rel (0) target = $region5
    $region4: #{_general_attention_impl.1} parent=1 // pred_region
      _
    $region5: #{_general_attention_impl.1} parent=1 // pred_fallthru
      _
    // Predicated region
    $region6: #{_general_attention_impl.1} parent=1 // pred_check
      _
    $region7: #{_general_attention_impl.1} parent=1 // pred_check_branch
      %15 = sbr.rel (0) target = $region9
    $region8: #{_general_attention_impl.1} parent=1 // pred_region
      _
    $region9: #{_general_attention_impl.1} parent=1 // pred_fallthru
      _
    // Predicated region
    $region10: #{_general_attention_impl.1} parent=1 // pred_check
      _
    $region11: #{_general_attention_impl.1} parent=1 // pred_check_branch
      %17 = sbr.rel (0) target = $region13
    $region12: #{_general_attention_impl.1} parent=1 // pred_region
      _
    $region13: #{_general_attention_impl.1} parent=1 // pred_fallthru
      _
    %v18 = vld [vmem:[%s0] sm:$0xff]
    %v19 = vld [vmem:[%s0 + $0x8] sm:$0xff]
    %v20 = vld [vmem:[%s1] sm:$0xff]
    %v21 = vld [vmem:[%s1 + $0x8] sm:$0xff]
    %v22 = vld [vmem:[%s2] sm:$0xff]
    %v23 = vld [vmem:[%s2 + $0x8] sm:$0xff]
    %vm24 = vcmask 261120
    %v26 = vsel %vm24, %v18, 0
    %v29 = vsel %vm24, %v20, 0
    %31 = vmatprep.subr.mxu0 0.0
    %v32 = vand.u32 %v29, 4294901760
    %33 = vmatpush1.xpose.msra.mxu0 %v32
    %34 = vmatprep.subr.mxu0 0.0
    %35 = vmatpush1.xpose.msra.mxu0 0.0
    %36 = vmatprep.subr.mxu0 0.0
    %37 = vmatpush1.xpose.msra.mxu0 0.0
    %38 = vmatprep.subr.mxu0 0.0
    %39 = vmatpush1.xpose.msra.mxu0 0.0
    %40 = vmatprep.subr.mxu0 0.0
    %41 = vmatpush1.xpose.msra.mxu0 0.0
    %42 = vmatprep.subr.mxu0 0.0
    %43 = vmatpush1.xpose.msra.mxu0 0.0
    %44 = vmatprep.subr.mxu0 0.0
    %45 = vmatpush1.xpose.msra.mxu0 0.0
    %46 = vmatprep.subr.mxu0 0.0
    %47 = vmatpush1.xpose.msra.mxu0 0.0
    %48 = vmatprep.subr.mxu0 0.0
    %49 = vmatpush1.xpose.msra.mxu0 0.0
    %50 = vmatprep.subr.mxu0 0.0
    %51 = vmatpush1.xpose.msra.mxu0 0.0
    %52 = vmatprep.subr.mxu0 0.0
    %53 = vmatpush1.xpose.msra.mxu0 0.0
    %54 = vmatprep.subr.mxu0 0.0
    %55 = vmatpush1.xpose.msra.mxu0 0.0
    %56 = vmatprep.subr.mxu0 0.0
    %57 = vmatpush1.xpose.msra.mxu0 0.0
    %58 = vmatprep.subr.mxu0 0.0
    %59 = vmatpush1.xpose.msra.mxu0 0.0
    %60 = vmatprep.subr.mxu0 0.0
    %61 = vmatpush1.xpose.msra.mxu0 0.0
    %62 = vmatprep.subr.mxu0 0.0
    %63 = vmatpush1.xpose.msra.mxu0 0.0
    %64 = vmatprep.subr.mxu0 0.0
    %65 = vmatpush1.xpose.msra.mxu0 0.0
    %66 = vmatprep.subr.mxu0 0.0
    %67 = vmatpush1.xpose.msra.mxu0 0.0
    %68 = vmatprep.subr.mxu0 0.0
    %69 = vmatpush1.xpose.msra.mxu0 0.0
    %70 = vmatprep.subr.mxu0 0.0
    %71 = vmatpush1.xpose.msra.mxu0 0.0
    %72 = vmatprep.subr.mxu0 0.0
    %73 = vmatpush1.xpose.msra.mxu0 0.0
    %74 = vmatprep.subr.mxu0 0.0
    %75 = vmatpush1.xpose.msra.mxu0 0.0
    %76 = vmatprep.subr.mxu0 0.0
    %77 = vmatpush1.xpose.msra.mxu0 0.0
    %78 = vmatprep.subr.mxu0 0.0
    %79 = vmatpush1.xpose.msra.mxu0 0.0
    %80 = vmatprep.subr.mxu0 0.0
    %81 = vmatpush1.xpose.msra.mxu0 0.0
    %82 = vmatprep.subr.mxu0 0.0
    %83 = vmatpush1.xpose.msra.mxu0 0.0
    %84 = vmatprep.subr.mxu0 0.0
    %85 = vmatpush1.xpose.msra.mxu0 0.0
    %86 = vmatprep.subr.mxu0 0.0
    %87 = vmatpush1.xpose.msra.mxu0 0.0
    %88 = vmatprep.subr.mxu0 0.0
    %89 = vmatpush1.xpose.msra.mxu0 0.0
    %90 = vmatprep.subr.mxu0 0.0
    %91 = vmatpush1.xpose.msra.mxu0 0.0
    %92 = vmatprep.subr.mxu0 0.0
    %93 = vmatpush1.xpose.msra.mxu0 0.0
    %94 = vmatprep.subr.mxu0 0.0
    %95 = vmatpush1.xpose.msra.mxu0 0.0
    %96 = vmatprep.mubr.f32.mxu0 0.0
    %v97 = vand.u32 %v26, 4294901760
    %v98 = vsub.f32 %v26, %v97
    %v99 = vand.u32 %v98, 4294901760
    %v100 = vsub.f32 %v98, %v99
    %v101 = vand.u32 %v100, 4294901760
    %102 = vmatmul.mubr.f32.gmra.mrb[0].mxu0 %v101
    %v103 = vpop.f32.mrb[0].mxu0
    %v104 = vadd.f32 0.0, %v103
    %v105 = vpop.f32.mrb[0].mxu0
    %106 = vdwg.mxu0
    %107 = vmatprep.subr.mxu0 0.0
    %v108 = vand.u32 %v29, 4294901760
    %v109 = vsub.f32 %v29, %v108
    %v110 = vand.u32 %v109, 4294901760
    %v111 = vsub.f32 %v109, %v110
    %v112 = vand.u32 %v111, 4294901760
    %113 = vmatpush1.xpose.msra.mxu0 %v112
    %114 = vmatprep.subr.mxu0 0.0
    %115 = vmatpush1.xpose.msra.mxu0 0.0
    %116 = vmatprep.subr.mxu0 0.0
    %117 = vmatpush1.xpose.msra.mxu0 0.0
    %118 = vmatprep.subr.mxu0 0.0
    %119 = vmatpush1.xpose.msra.mxu0 0.0
    %120 = vmatprep.subr.mxu0 0.0
    %121 = vmatpush1.xpose.msra.mxu0 0.0
    %122 = vmatprep.subr.mxu0 0.0
    %123 = vmatpush1.xpose.msra.mxu0 0.0
    %124 = vmatprep.subr.mxu0 0.0
    %125 = vmatpush1.xpose.msra.mxu0 0.0
    %126 = vmatprep.subr.mxu0 0.0
    %127 = vmatpush1.xpose.msra.mxu0 0.0
    %128 = vmatprep.subr.mxu0 0.0
    %129 = vmatpush1.xpose.msra.mxu0 0.0
    %130 = vmatprep.subr.mxu0 0.0
    %131 = vmatpush1.xpose.msra.mxu0 0.0
    %132 = vmatprep.subr.mxu0 0.0
    %133 = vmatpush1.xpose.msra.mxu0 0.0
    %134 = vmatprep.subr.mxu0 0.0
    %135 = vmatpush1.xpose.msra.mxu0 0.0
    %136 = vmatprep.subr.mxu0 0.0
    %137 = vmatpush1.xpose.msra.mxu0 0.0
    %138 = vmatprep.subr.mxu0 0.0
    %139 = vmatpush1.xpose.msra.mxu0 0.0
    %140 = vmatprep.subr.mxu0 0.0
    %141 = vmatpush1.xpose.msra.mxu0 0.0
    %142 = vmatprep.subr.mxu0 0.0
    %143 = vmatpush1.xpose.msra.mxu0 0.0
    %144 = vmatprep.subr.mxu0 0.0
    %145 = vmatpush1.xpose.msra.mxu0 0.0
    %146 = vmatprep.subr.mxu0 0.0
    %147 = vmatpush1.xpose.msra.mxu0 0.0
    %148 = vmatprep.subr.mxu0 0.0
    %149 = vmatpush1.xpose.msra.mxu0 0.0
    %150 = vmatprep.subr.mxu0 0.0
    %151 = vmatpush1.xpose.msra.mxu0 0.0
    %152 = vmatprep.subr.mxu0 0.0
    %153 = vmatpush1.xpose.msra.mxu0 0.0
    %154 = vmatprep.subr.mxu0 0.0
    %155 = vmatpush1.xpose.msra.mxu0 0.0
    %156 = vmatprep.subr.mxu0 0.0
    %157 = vmatpush1.xpose.msra.mxu0 0.0
    %158 = vmatprep.subr.mxu0 0.0
    %159 = vmatpush1.xpose.msra.mxu0 0.0
    %160 = vmatprep.subr.mxu0 0.0
    %161 = vmatpush1.xpose.msra.mxu0 0.0
    %162 = vmatprep.subr.mxu0 0.0
    %163 = vmatpush1.xpose.msra.mxu0 0.0
    %164 = vmatprep.subr.mxu0 0.0
    %165 = vmatpush1.xpose.msra.mxu0 0.0
    %166 = vmatprep.subr.mxu0 0.0
    %167 = vmatpush1.xpose.msra.mxu0 0.0
    %168 = vmatprep.subr.mxu0 0.0
    %169 = vmatpush1.xpose.msra.mxu0 0.0
    %170 = vmatprep.subr.mxu0 0.0
    %171 = vmatpush1.xpose.msra.mxu0 0.0
    %172 = vmatprep.subr.mxu0 0.0
    %173 = vmatpush1.xpose.msra.mxu0 0.0
    %174 = vmatprep.subr.mxu0 0.0
    %175 = vmatpush1.xpose.msra.mxu0 0.0
    %176 = vmatprep.mubr.f32.mxu0 0.0
    %v177 = vand.u32 %v26, 4294901760
    %178 = vmatmul.mubr.f32.gmra.mrb[0].mxu0 %v177
    %v179 = vpop.f32.mrb[0].mxu0
    %v180 = vadd.f32 %v104, %v179
    %v181 = vpop.f32.mrb[0].mxu0
    %182 = vdwg.mxu0
    %183 = vmatprep.subr.mxu0 0.0
    %v184 = vand.u32 %v29, 4294901760
    %v185 = vsub.f32 %v29, %v184
    %186 = vmatpush1.xpose.msra.mxu0 %v185
    %187 = vmatprep.subr.mxu0 0.0
    %188 = vmatpush1.xpose.msra.mxu0 0.0
    %189 = vmatprep.subr.mxu0 0.0
    %190 = vmatpush1.xpose.msra.mxu0 0.0
    %191 = vmatprep.subr.mxu0 0.0
    %192 = vmatpush1.xpose.msra.mxu0 0.0
    %193 = vmatprep.subr.mxu0 0.0
    %194 = vmatpush1.xpose.msra.mxu0 0.0
    %195 = vmatprep.subr.mxu0 0.0
    %196 = vmatpush1.xpose.msra.mxu0 0.0
    %197 = vmatprep.subr.mxu0 0.0
    %198 = vmatpush1.xpose.msra.mxu0 0.0
    %199 = vmatprep.subr.mxu0 0.0
    %200 = vmatpush1.xpose.msra.mxu0 0.0
    %201 = vmatprep.subr.mxu0 0.0
    %202 = vmatpush1.xpose.msra.mxu0 0.0
    %203 = vmatprep.subr.mxu0 0.0
    %204 = vmatpush1.xpose.msra.mxu0 0.0
    %205 = vmatprep.subr.mxu0 0.0
    %206 = vmatpush1.xpose.msra.mxu0 0.0
    %207 = vmatprep.subr.mxu0 0.0
    %208 = vmatpush1.xpose.msra.mxu0 0.0
    %209 = vmatprep.subr.mxu0 0.0
    %210 = vmatpush1.xpose.msra.mxu0 0.0
    %211 = vmatprep.subr.mxu0 0.0
    %212 = vmatpush1.xpose.msra.mxu0 0.0
    %213 = vmatprep.subr.mxu0 0.0
    %214 = vmatpush1.xpose.msra.mxu0 0.0
    %215 = vmatprep.subr.mxu0 0.0
    %216 = vmatpush1.xpose.msra.mxu0 0.0
    %217 = vmatprep.subr.mxu0 0.0
    %218 = vmatpush1.xpose.msra.mxu0 0.0
    %219 = vmatprep.subr.mxu0 0.0
    %220 = vmatpush1.xpose.msra.mxu0 0.0
    %221 = vmatprep.subr.mxu0 0.0
    %222 = vmatpush1.xpose.msra.mxu0 0.0
    %223 = vmatprep.subr.mxu0 0.0
    %224 = vmatpush1.xpose.msra.mxu0 0.0
    %225 = vmatprep.subr.mxu0 0.0
    %226 = vmatpush1.xpose.msra.mxu0 0.0
    %227 = vmatprep.subr.mxu0 0.0
    %228 = vmatpush1.xpose.msra.mxu0 0.0
    %229 = vmatprep.subr.mxu0 0.0
    %230 = vmatpush1.xpose.msra.mxu0 0.0
    %231 = vmatprep.subr.mxu0 0.0
    %232 = vmatpush1.xpose.msra.mxu0 0.0
    %233 = vmatprep.subr.mxu0 0.0
    %234 = vmatpush1.xpose.msra.mxu0 0.0
    %235 = vmatprep.subr.mxu0 0.0
    %236 = vmatpush1.xpose.msra.mxu0 0.0
    %237 = vmatprep.subr.mxu0 0.0
    %238 = vmatpush1.xpose.msra.mxu0 0.0
    %239 = vmatprep.subr.mxu0 0.0
    %240 = vmatpush1.xpose.msra.mxu0 0.0
    %241 = vmatprep.subr.mxu0 0.0
    %242 = vmatpush1.xpose.msra.mxu0 0.0
    %243 = vmatprep.subr.mxu0 0.0
    %244 = vmatpush1.xpose.msra.mxu0 0.0
    %245 = vmatprep.subr.mxu0 0.0
    %246 = vmatpush1.xpose.msra.mxu0 0.0
    %247 = vmatprep.subr.mxu0 0.0
    %248 = vmatpush1.xpose.msra.mxu0 0.0
    %249 = vmatprep.mubr.f32.mxu0 0.0
    %v250 = vand.u32 %v26, 4294901760
    %v251 = vsub.f32 %v26, %v250
    %252 = vmatmul.mubr.f32.gmra.mrb[0].mxu0 %v251
    %v253 = vpop.f32.mrb[0].mxu0
    %v254 = vadd.f32 %v180, %v253
    %v255 = vpop.f32.mrb[0].mxu0
    %256 = vdwg.mxu0
    %257 = vmatprep.subr.mxu0 0.0
    %v258 = vand.u32 %v29, 4294901760
    %259 = vmatpush1.xpose.msra.mxu0 %v258
    %260 = vmatprep.subr.mxu0 0.0
    %261 = vmatpush1.xpose.msra.mxu0 0.0
    %262 = vmatprep.subr.mxu0 0.0
    %263 = vmatpush1.xpose.msra.mxu0 0.0
    %264 = vmatprep.subr.mxu0 0.0
    %265 = vmatpush1.xpose.msra.mxu0 0.0
    %266 = vmatprep.subr.mxu0 0.0
    %267 = vmatpush1.xpose.msra.mxu0 0.0
    %268 = vmatprep.subr.mxu0 0.0
    %269 = vmatpush1.xpose.msra.mxu0 0.0
    %270 = vmatprep.subr.mxu0 0.0
    %271 = vmatpush1.xpose.msra.mxu0 0.0
    %272 = vmatprep.subr.mxu0 0.0
    %273 = vmatpush1.xpose.msra.mxu0 0.0
    %274 = vmatprep.subr.mxu0 0.0
    %275 = vmatpush1.xpose.msra.mxu0 0.0
    %276 = vmatprep.subr.mxu0 0.0
    %277 = vmatpush1.xpose.msra.mxu0 0.0
    %278 = vmatprep.subr.mxu0 0.0
    %279 = vmatpush1.xpose.msra.mxu0 0.0
    %280 = vmatprep.subr.mxu0 0.0
    %281 = vmatpush1.xpose.msra.mxu0 0.0
    %282 = vmatprep.subr.mxu0 0.0
    %283 = vmatpush1.xpose.msra.mxu0 0.0
    %284 = vmatprep.subr.mxu0 0.0
    %285 = vmatpush1.xpose.msra.mxu0 0.0
    %286 = vmatprep.subr.mxu0 0.0
    %287 = vmatpush1.xpose.msra.mxu0 0.0
    %288 = vmatprep.subr.mxu0 0.0
    %289 = vmatpush1.xpose.msra.mxu0 0.0
    %290 = vmatprep.subr.mxu0 0.0
    %291 = vmatpush1.xpose.msra.mxu0 0.0
    %292 = vmatprep.subr.mxu0 0.0
    %293 = vmatpush1.xpose.msra.mxu0 0.0
    %294 = vmatprep.subr.mxu0 0.0
    %295 = vmatpush1.xpose.msra.mxu0 0.0
    %296 = vmatprep.subr.mxu0 0.0
    %297 = vmatpush1.xpose.msra.mxu0 0.0
    %298 = vmatprep.subr.mxu0 0.0
    %299 = vmatpush1.xpose.msra.mxu0 0.0
    %300 = vmatprep.subr.mxu0 0.0
    %301 = vmatpush1.xpose.msra.mxu0 0.0
    %302 = vmatprep.subr.mxu0 0.0
    %303 = vmatpush1.xpose.msra.mxu0 0.0
    %304 = vmatprep.subr.mxu0 0.0
    %305 = vmatpush1.xpose.msra.mxu0 0.0
    %306 = vmatprep.subr.mxu0 0.0
    %307 = vmatpush1.xpose.msra.mxu0 0.0
    %308 = vmatprep.subr.mxu0 0.0
    %309 = vmatpush1.xpose.msra.mxu0 0.0
    %310 = vmatprep.subr.mxu0 0.0
    %311 = vmatpush1.xpose.msra.mxu0 0.0
    %312 = vmatprep.subr.mxu0 0.0
    %313 = vmatpush1.xpose.msra.mxu0 0.0
    %314 = vmatprep.subr.mxu0 0.0
    %315 = vmatpush1.xpose.msra.mxu0 0.0
    %316 = vmatprep.subr.mxu0 0.0
    %317 = vmatpush1.xpose.msra.mxu0 0.0
    %318 = vmatprep.subr.mxu0 0.0
    %319 = vmatpush1.xpose.msra.mxu0 0.0
    %320 = vmatprep.subr.mxu0 0.0
    %321 = vmatpush1.xpose.msra.mxu0 0.0
    %322 = vmatprep.mubr.f32.mxu0 0.0
    %v323 = vand.u32 %v26, 4294901760
    %v324 = vsub.f32 %v26, %v323
    %v325 = vand.u32 %v324, 4294901760
    %326 = vmatmul.mubr.f32.gmra.mrb[0].mxu0 %v325
    %v327 = vpop.f32.mrb[0].mxu0
    %v328 = vadd.f32 %v254, %v327
    %v329 = vpop.f32.mrb[0].mxu0
    %330 = vdwg.mxu0
    %331 = vmatprep.subr.mxu0 0.0
    %v332 = vand.u32 %v29, 4294901760
    %v333 = vsub.f32 %v29, %v332
    %v334 = vand.u32 %v333, 4294901760
    %335 = vmatpush1.xpose.msra.mxu0 %v334
    %336 = vmatprep.subr.mxu0 0.0
    %337 = vmatpush1.xpose.msra.mxu0 0.0
    %338 = vmatprep.subr.mxu0 0.0
    %339 = vmatpush1.xpose.msra.mxu0 0.0
    %340 = vmatprep.subr.mxu0 0.0
    %341 = vmatpush1.xpose.msra.mxu0 0.0
    %342 = vmatprep.subr.mxu0 0.0
    %343 = vmatpush1.xpose.msra.mxu0 0.0
    %344 = vmatprep.subr.mxu0 0.0
    %345 = vmatpush1.xpose.msra.mxu0 0.0
    %346 = vmatprep.subr.mxu0 0.0
    %347 = vmatpush1.xpose.msra.mxu0 0.0
    %348 = vmatprep.subr.mxu0 0.0
    %349 = vmatpush1.xpose.msra.mxu0 0.0
    %350 = vmatprep.subr.mxu0 0.0
    %351 = vmatpush1.xpose.msra.mxu0 0.0
    %352 = vmatprep.subr.mxu0 0.0
    %353 = vmatpush1.xpose.msra.mxu0 0.0
    %354 = vmatprep.subr.mxu0 0.0
    %355 = vmatpush1.xpose.msra.mxu0 0.0
    %356 = vmatprep.subr.mxu0 0.0
    %357 = vmatpush1.xpose.msra.mxu0 0.0
    %358 = vmatprep.subr.mxu0 0.0
    %359 = vmatpush1.xpose.msra.mxu0 0.0
    %360 = vmatprep.subr.mxu0 0.0
    %361 = vmatpush1.xpose.msra.mxu0 0.0
    %362 = vmatprep.subr.mxu0 0.0
    %363 = vmatpush1.xpose.msra.mxu0 0.0
    %364 = vmatprep.subr.mxu0 0.0
    %365 = vmatpush1.xpose.msra.mxu0 0.0
    %366 = vmatprep.subr.mxu0 0.0
    %367 = vmatpush1.xpose.msra.mxu0 0.0
    %368 = vmatprep.subr.mxu0 0.0
    %369 = vmatpush1.xpose.msra.mxu0 0.0
    %370 = vmatprep.subr.mxu0 0.0
    %371 = vmatpush1.xpose.msra.mxu0 0.0
    %372 = vmatprep.subr.mxu0 0.0
    %373 = vmatpush1.xpose.msra.mxu0 0.0
    %374 = vmatprep.subr.mxu0 0.0
    %375 = vmatpush1.xpose.msra.mxu0 0.0
    %376 = vmatprep.subr.mxu0 0.0
    %377 = vmatpush1.xpose.msra.mxu0 0.0
    %378 = vmatprep.subr.mxu0 0.0
    %379 = vmatpush1.xpose.msra.mxu0 0.0
    %380 = vmatprep.subr.mxu0 0.0
    %381 = vmatpush1.xpose.msra.mxu0 0.0
    %382 = vmatprep.subr.mxu0 0.0
    %383 = vmatpush1.xpose.msra.mxu0 0.0
    %384 = vmatprep.subr.mxu0 0.0
    %385 = vmatpush1.xpose.msra.mxu0 0.0
    %386 = vmatprep.subr.mxu0 0.0
    %387 = vmatpush1.xpose.msra.mxu0 0.0
    %388 = vmatprep.subr.mxu0 0.0
    %389 = vmatpush1.xpose.msra.mxu0 0.0
    %390 = vmatprep.subr.mxu0 0.0
    %391 = vmatpush1.xpose.msra.mxu0 0.0
    %392 = vmatprep.subr.mxu0 0.0
    %393 = vmatpush1.xpose.msra.mxu0 0.0
    %394 = vmatprep.subr.mxu0 0.0
    %395 = vmatpush1.xpose.msra.mxu0 0.0
    %396 = vmatprep.subr.mxu0 0.0
    %397 = vmatpush1.xpose.msra.mxu0 0.0
    %398 = vmatprep.mubr.f32.mxu0 0.0
    %v399 = vand.u32 %v26, 4294901760
    %400 = vmatmul.mubr.f32.gmra.mrb[0].mxu0 %v399
    %v401 = vpop.f32.mrb[0].mxu0
    %v402 = vadd.f32 %v328, %v401
    %v403 = vpop.f32.mrb[0].mxu0
    %404 = vdwg.mxu0
    %405 = vmatprep.subr.mxu0 0.0
    %v406 = vand.u32 %v29, 4294901760
    %407 = vmatpush1.xpose.msra.mxu0 %v406
    %408 = vmatprep.subr.mxu0 0.0
    %409 = vmatpush1.xpose.msra.mxu0 0.0
    %410 = vmatprep.subr.mxu0 0.0
    %411 = vmatpush1.xpose.msra.mxu0 0.0
    %412 = vmatprep.subr.mxu0 0.0
    %413 = vmatpush1.xpose.msra.mxu0 0.0
    %414 = vmatprep.subr.mxu0 0.0
    %415 = vmatpush1.xpose.msra.mxu0 0.0
    %416 = vmatprep.subr.mxu0 0.0
    %417 = vmatpush1.xpose.msra.mxu0 0.0
    %418 = vmatprep.subr.mxu0 0.0
    %419 = vmatpush1.xpose.msra.mxu0 0.0
    %420 = vmatprep.subr.mxu0 0.0
    %421 = vmatpush1.xpose.msra.mxu0 0.0
    %422 = vmatprep.subr.mxu0 0.0
    %423 = vmatpush1.xpose.msra.mxu0 0.0
    %424 = vmatprep.subr.mxu0 0.0
    %425 = vmatpush1.xpose.msra.mxu0 0.0
    %426 = vmatprep.subr.mxu0 0.0
    %427 = vmatpush1.xpose.msra.mxu0 0.0
    %428 = vmatprep.subr.mxu0 0.0
    %429 = vmatpush1.xpose.msra.mxu0 0.0
    %430 = vmatprep.subr.mxu0 0.0
    %431 = vmatpush1.xpose.msra.mxu0 0.0
    %432 = vmatprep.subr.mxu0 0.0
    %433 = vmatpush1.xpose.msra.mxu0 0.0
    %434 = vmatprep.subr.mxu0 0.0
    %435 = vmatpush1.xpose.msra.mxu0 0.0
    %436 = vmatprep.subr.mxu0 0.0
    %437 = vmatpush1.xpose.msra.mxu0 0.0
    %438 = vmatprep.subr.mxu0 0.0
    %439 = vmatpush1.xpose.msra.mxu0 0.0
    %440 = vmatprep.subr.mxu0 0.0
    %441 = vmatpush1.xpose.msra.mxu0 0.0
    %442 = vmatprep.subr.mxu0 0.0
    %443 = vmatpush1.xpose.msra.mxu0 0.0
    %444 = vmatprep.subr.mxu0 0.0
    %445 = vmatpush1.xpose.msra.mxu0 0.0
    %446 = vmatprep.subr.mxu0 0.0
    %447 = vmatpush1.xpose.msra.mxu0 0.0
    %448 = vmatprep.subr.mxu0 0.0
    %449 = vmatpush1.xpose.msra.mxu0 0.0
    %450 = vmatprep.subr.mxu0 0.0
    %451 = vmatpush1.xpose.msra.mxu0 0.0
    %452 = vmatprep.subr.mxu0 0.0
    %453 = vmatpush1.xpose.msra.mxu0 0.0
    %454 = vmatprep.subr.mxu0 0.0
    %455 = vmatpush1.xpose.msra.mxu0 0.0
    %456 = vmatprep.subr.mxu0 0.0
    %457 = vmatpush1.xpose.msra.mxu0 0.0
    %458 = vmatprep.subr.mxu0 0.0
    %459 = vmatpush1.xpose.msra.mxu0 0.0
    %460 = vmatprep.subr.mxu0 0.0
    %461 = vmatpush1.xpose.msra.mxu0 0.0
    %462 = vmatprep.subr.mxu0 0.0
    %463 = vmatpush1.xpose.msra.mxu0 0.0
    %464 = vmatprep.subr.mxu0 0.0
    %465 = vmatpush1.xpose.msra.mxu0 0.0
    %466 = vmatprep.subr.mxu0 0.0
    %467 = vmatpush1.xpose.msra.mxu0 0.0
    %468 = vmatprep.subr.mxu0 0.0
    %469 = vmatpush1.xpose.msra.mxu0 0.0
    %470 = vmatprep.mubr.f32.mxu0 0.0
    %v471 = vand.u32 %v26, 4294901760
    %472 = vmatmul.mubr.f32.gmra.mrb[0].mxu0 %v471
    %v473 = vpop.f32.mrb[0].mxu0
    %v474 = vadd.f32 %v402, %v473
    %v475 = vpop.f32.mrb[0].mxu0
    %476 = vdwg.mxu0
    %v478 = vsel %vm24, %v19, 0
    %v481 = vsel %vm24, %v21, 0
    %483 = vmatprep.subr.mxu0 0.0
    %v484 = vand.u32 %v481, 4294901760
    %485 = vmatpush1.xpose.msra.mxu0 %v484
    %486 = vmatprep.subr.mxu0 0.0
    %487 = vmatpush1.xpose.msra.mxu0 0.0
    %488 = vmatprep.subr.mxu0 0.0
    %489 = vmatpush1.xpose.msra.mxu0 0.0
    %490 = vmatprep.subr.mxu0 0.0
    %491 = vmatpush1.xpose.msra.mxu0 0.0
    %492 = vmatprep.subr.mxu0 0.0
    %493 = vmatpush1.xpose.msra.mxu0 0.0
    %494 = vmatprep.subr.mxu0 0.0
    %495 = vmatpush1.xpose.msra.mxu0 0.0
    %496 = vmatprep.subr.mxu0 0.0
    %497 = vmatpush1.xpose.msra.mxu0 0.0
    %498 = vmatprep.subr.mxu0 0.0
    %499 = vmatpush1.xpose.msra.mxu0 0.0
    %500 = vmatprep.subr.mxu0 0.0
    %501 = vmatpush1.xpose.msra.mxu0 0.0
    %502 = vmatprep.subr.mxu0 0.0
    %503 = vmatpush1.xpose.msra.mxu0 0.0
    %504 = vmatprep.subr.mxu0 0.0
    %505 = vmatpush1.xpose.msra.mxu0 0.0
    %506 = vmatprep.subr.mxu0 0.0
    %507 = vmatpush1.xpose.msra.mxu0 0.0
    %508 = vmatprep.subr.mxu0 0.0
    %509 = vmatpush1.xpose.msra.mxu0 0.0
    %510 = vmatprep.subr.mxu0 0.0
    %511 = vmatpush1.xpose.msra.mxu0 0.0
    %512 = vmatprep.subr.mxu0 0.0
    %513 = vmatpush1.xpose.msra.mxu0 0.0
    %514 = vmatprep.subr.mxu0 0.0
    %515 = vmatpush1.xpose.msra.mxu0 0.0
    %516 = vmatprep.subr.mxu0 0.0
    %517 = vmatpush1.xpose.msra.mxu0 0.0
    %518 = vmatprep.subr.mxu0 0.0
    %519 = vmatpush1.xpose.msra.mxu0 0.0
    %520 = vmatprep.subr.mxu0 0.0
    %521 = vmatpush1.xpose.msra.mxu0 0.0
    %522 = vmatprep.subr.mxu0 0.0
    %523 = vmatpush1.xpose.msra.mxu0 0.0
    %524 = vmatprep.subr.mxu0 0.0
    %525 = vmatpush1.xpose.msra.mxu0 0.0
    %526 = vmatprep.subr.mxu0 0.0
    %527 = vmatpush1.xpose.msra.mxu0 0.0
    %528 = vmatprep.subr.mxu0 0.0
    %529 = vmatpush1.xpose.msra.mxu0 0.0
    %530 = vmatprep.subr.mxu0 0.0
    %531 = vmatpush1.xpose.msra.mxu0 0.0
    %532 = vmatprep.subr.mxu0 0.0
    %533 = vmatpush1.xpose.msra.mxu0 0.0
    %534 = vmatprep.subr.mxu0 0.0
    %535 = vmatpush1.xpose.msra.mxu0 0.0
    %536 = vmatprep.subr.mxu0 0.0
    %537 = vmatpush1.xpose.msra.mxu0 0.0
    %538 = vmatprep.subr.mxu0 0.0
    %539 = vmatpush1.xpose.msra.mxu0 0.0
    %540 = vmatprep.subr.mxu0 0.0
    %541 = vmatpush1.xpose.msra.mxu0 0.0
    %542 = vmatprep.subr.mxu0 0.0
    %543 = vmatpush1.xpose.msra.mxu0 0.0
    %544 = vmatprep.subr.mxu0 0.0
    %545 = vmatpush1.xpose.msra.mxu0 0.0
    %546 = vmatprep.subr.mxu0 0.0
    %547 = vmatpush1.xpose.msra.mxu0 0.0
    %548 = vmatprep.mubr.f32.mxu0 0.0
    %v549 = vand.u32 %v478, 4294901760
    %v550 = vsub.f32 %v478, %v549
    %v551 = vand.u32 %v550, 4294901760
    %v552 = vsub.f32 %v550, %v551
    %v553 = vand.u32 %v552, 4294901760
    %554 = vmatmul.mubr.f32.gmra.mrb[0].mxu0 %v553
    %v555 = vpop.f32.mrb[0].mxu0
    %v556 = vadd.f32 0.0, %v555
    %v557 = vpop.f32.mrb[0].mxu0
    %558 = vdwg.mxu0
    %559 = vmatprep.subr.mxu0 0.0
    %v560 = vand.u32 %v481, 4294901760
    %v561 = vsub.f32 %v481, %v560
    %v562 = vand.u32 %v561, 4294901760
    %v563 = vsub.f32 %v561, %v562
    %v564 = vand.u32 %v563, 4294901760
    %565 = vmatpush1.xpose.msra.mxu0 %v564
    %566 = vmatprep.subr.mxu0 0.0
    %567 = vmatpush1.xpose.msra.mxu0 0.0
    %568 = vmatprep.subr.mxu0 0.0
    %569 = vmatpush1.xpose.msra.mxu0 0.0
    %570 = vmatprep.subr.mxu0 0.0
    %571 = vmatpush1.xpose.msra.mxu0 0.0
    %572 = vmatprep.subr.mxu0 0.0
    %573 = vmatpush1.xpose.msra.mxu0 0.0
    %574 = vmatprep.subr.mxu0 0.0
    %575 = vmatpush1.xpose.msra.mxu0 0.0
    %576 = vmatprep.subr.mxu0 0.0
    %577 = vmatpush1.xpose.msra.mxu0 0.0
    %578 = vmatprep.subr.mxu0 0.0
    %579 = vmatpush1.xpose.msra.mxu0 0.0
    %580 = vmatprep.subr.mxu0 0.0
    %581 = vmatpush1.xpose.msra.mxu0 0.0
    %582 = vmatprep.subr.mxu0 0.0
    %583 = vmatpush1.xpose.msra.mxu0 0.0
    %584 = vmatprep.subr.mxu0 0.0
    %585 = vmatpush1.xpose.msra.mxu0 0.0
    %586 = vmatprep.subr.mxu0 0.0
    %587 = vmatpush1.xpose.msra.mxu0 0.0
    %588 = vmatprep.subr.mxu0 0.0
    %589 = vmatpush1.xpose.msra.mxu0 0.0
    %590 = vmatprep.subr.mxu0 0.0
    %591 = vmatpush1.xpose.msra.mxu0 0.0
    %592 = vmatprep.subr.mxu0 0.0
    %593 = vmatpush1.xpose.msra.mxu0 0.0
    %594 = vmatprep.subr.mxu0 0.0
    %595 = vmatpush1.xpose.msra.mxu0 0.0
    %596 = vmatprep.subr.mxu0 0.0
    %597 = vmatpush1.xpose.msra.mxu0 0.0
    %598 = vmatprep.subr.mxu0 0.0
    %599 = vmatpush1.xpose.msra.mxu0 0.0
    %600 = vmatprep.subr.mxu0 0.0
    %601 = vmatpush1.xpose.msra.mxu0 0.0
    %602 = vmatprep.subr.mxu0 0.0
    %603 = vmatpush1.xpose.msra.mxu0 0.0
    %604 = vmatprep.subr.mxu0 0.0
    %605 = vmatpush1.xpose.msra.mxu0 0.0
    %606 = vmatprep.subr.mxu0 0.0
    %607 = vmatpush1.xpose.msra.mxu0 0.0
    %608 = vmatprep.subr.mxu0 0.0
    %609 = vmatpush1.xpose.msra.mxu0 0.0
    %610 = vmatprep.subr.mxu0 0.0
    %611 = vmatpush1.xpose.msra.mxu0 0.0
    %612 = vmatprep.subr.mxu0 0.0
    %613 = vmatpush1.xpose.msra.mxu0 0.0
    %614 = vmatprep.subr.mxu0 0.0
    %615 = vmatpush1.xpose.msra.mxu0 0.0
    %616 = vmatprep.subr.mxu0 0.0
    %617 = vmatpush1.xpose.msra.mxu0 0.0
    %618 = vmatprep.subr.mxu0 0.0
    %619 = vmatpush1.xpose.msra.mxu0 0.0
    %620 = vmatprep.subr.mxu0 0.0
    %621 = vmatpush1.xpose.msra.mxu0 0.0
    %622 = vmatprep.subr.mxu0 0.0
    %623 = vmatpush1.xpose.msra.mxu0 0.0
    %624 = vmatprep.subr.mxu0 0.0
    %625 = vmatpush1.xpose.msra.mxu0 0.0
    %626 = vmatprep.subr.mxu0 0.0
    %627 = vmatpush1.xpose.msra.mxu0 0.0
    %628 = vmatprep.mubr.f32.mxu0 0.0
    %v629 = vand.u32 %v478, 4294901760
    %630 = vmatmul.mubr.f32.gmra.mrb[0].mxu0 %v629
    %v631 = vpop.f32.mrb[0].mxu0
    %v632 = vadd.f32 %v556, %v631
    %v633 = vpop.f32.mrb[0].mxu0
    %634 = vdwg.mxu0
    %635 = vmatprep.subr.mxu0 0.0
    %v636 = vand.u32 %v481, 4294901760
    %v637 = vsub.f32 %v481, %v636
    %638 = vmatpush1.xpose.msra.mxu0 %v637
    %639 = vmatprep.subr.mxu0 0.0
    %640 = vmatpush1.xpose.msra.mxu0 0.0
    %641 = vmatprep.subr.mxu0 0.0
    %642 = vmatpush1.xpose.msra.mxu0 0.0
    %643 = vmatprep.subr.mxu0 0.0
    %644 = vmatpush1.xpose.msra.mxu0 0.0
    %645 = vmatprep.subr.mxu0 0.0
    %646 = vmatpush1.xpose.msra.mxu0 0.0
    %647 = vmatprep.subr.mxu0 0.0
    %648 = vmatpush1.xpose.msra.mxu0 0.0
    %649 = vmatprep.subr.mxu0 0.0
    %650 = vmatpush1.xpose.msra.mxu0 0.0
    %651 = vmatprep.subr.mxu0 0.0
    %652 = vmatpush1.xpose.msra.mxu0 0.0
    %653 = vmatprep.subr.mxu0 0.0
    %654 = vmatpush1.xpose.msra.mxu0 0.0
    %655 = vmatprep.subr.mxu0 0.0
    %656 = vmatpush1.xpose.msra.mxu0 0.0
    %657 = vmatprep.subr.mxu0 0.0
    %658 = vmatpush1.xpose.msra.mxu0 0.0
    %659 = vmatprep.subr.mxu0 0.0
    %660 = vmatpush1.xpose.msra.mxu0 0.0
    %661 = vmatprep.subr.mxu0 0.0
    %662 = vmatpush1.xpose.msra.mxu0 0.0
    %663 = vmatprep.subr.mxu0 0.0
    %664 = vmatpush1.xpose.msra.mxu0 0.0
    %665 = vmatprep.subr.mxu0 0.0
    %666 = vmatpush1.xpose.msra.mxu0 0.0
    %667 = vmatprep.subr.mxu0 0.0
    %668 = vmatpush1.xpose.msra.mxu0 0.0
    %669 = vmatprep.subr.mxu0 0.0
    %670 = vmatpush1.xpose.msra.mxu0 0.0
    %671 = vmatprep.subr.mxu0 0.0
    %672 = vmatpush1.xpose.msra.mxu0 0.0
    %673 = vmatprep.subr.mxu0 0.0
    %674 = vmatpush1.xpose.msra.mxu0 0.0
    %675 = vmatprep.subr.mxu0 0.0
    %676 = vmatpush1.xpose.msra.mxu0 0.0
    %677 = vmatprep.subr.mxu0 0.0
    %678 = vmatpush1.xpose.msra.mxu0 0.0
    %679 = vmatprep.subr.mxu0 0.0
    %680 = vmatpush1.xpose.msra.mxu0 0.0
    %681 = vmatprep.subr.mxu0 0.0
    %682 = vmatpush1.xpose.msra.mxu0 0.0
    %683 = vmatprep.subr.mxu0 0.0
    %684 = vmatpush1.xpose.msra.mxu0 0.0
    %685 = vmatprep.subr.mxu0 0.0
    %686 = vmatpush1.xpose.msra.mxu0 0.0
    %687 = vmatprep.subr.mxu0 0.0
    %688 = vmatpush1.xpose.msra.mxu0 0.0
    %689 = vmatprep.subr.mxu0 0.0
    %690 = vmatpush1.xpose.msra.mxu0 0.0
    %691 = vmatprep.subr.mxu0 0.0
    %692 = vmatpush1.xpose.msra.mxu0 0.0
    %693 = vmatprep.subr.mxu0 0.0
    %694 = vmatpush1.xpose.msra.mxu0 0.0
    %695 = vmatprep.subr.mxu0 0.0
    %696 = vmatpush1.xpose.msra.mxu0 0.0
    %697 = vmatprep.subr.mxu0 0.0
    %698 = vmatpush1.xpose.msra.mxu0 0.0
    %699 = vmatprep.subr.mxu0 0.0
    %700 = vmatpush1.xpose.msra.mxu0 0.0
    %701 = vmatprep.mubr.f32.mxu0 0.0
    %v702 = vand.u32 %v478, 4294901760
    %v703 = vsub.f32 %v478, %v702
    %704 = vmatmul.mubr.f32.gmra.mrb[0].mxu0 %v703
    %v705 = vpop.f32.mrb[0].mxu0
    %v706 = vadd.f32 %v632, %v705
    %v707 = vpop.f32.mrb[0].mxu0
    %708 = vdwg.mxu0
    %709 = vmatprep.subr.mxu0 0.0
    %v710 = vand.u32 %v481, 4294901760
    %711 = vmatpush1.xpose.msra.mxu0 %v710
    %712 = vmatprep.subr.mxu0 0.0
    %713 = vmatpush1.xpose.msra.mxu0 0.0
    %714 = vmatprep.subr.mxu0 0.0
    %715 = vmatpush1.xpose.msra.mxu0 0.0
    %716 = vmatprep.subr.mxu0 0.0
    %717 = vmatpush1.xpose.msra.mxu0 0.0
    %718 = vmatprep.subr.mxu0 0.0
    %719 = vmatpush1.xpose.msra.mxu0 0.0
    %720 = vmatprep.subr.mxu0 0.0
    %721 = vmatpush1.xpose.msra.mxu0 0.0
    %722 = vmatprep.subr.mxu0 0.0
    %723 = vmatpush1.xpose.msra.mxu0 0.0
    %724 = vmatprep.subr.mxu0 0.0
    %725 = vmatpush1.xpose.msra.mxu0 0.0
    %726 = vmatprep.subr.mxu0 0.0
    %727 = vmatpush1.xpose.msra.mxu0 0.0
    %728 = vmatprep.subr.mxu0 0.0
    %729 = vmatpush1.xpose.msra.mxu0 0.0
    %730 = vmatprep.subr.mxu0 0.0
    %731 = vmatpush1.xpose.msra.mxu0 0.0
    %732 = vmatprep.subr.mxu0 0.0
    %733 = vmatpush1.xpose.msra.mxu0 0.0
    %734 = vmatprep.subr.mxu0 0.0
    %735 = vmatpush1.xpose.msra.mxu0 0.0
    %736 = vmatprep.subr.mxu0 0.0
    %737 = vmatpush1.xpose.msra.mxu0 0.0
    %738 = vmatprep.subr.mxu0 0.0
    %739 = vmatpush1.xpose.msra.mxu0 0.0
    %740 = vmatprep.subr.mxu0 0.0
    %741 = vmatpush1.xpose.msra.mxu0 0.0
    %742 = vmatprep.subr.mxu0 0.0
    %743 = vmatpush1.xpose.msra.mxu0 0.0
    %744 = vmatprep.subr.mxu0 0.0
    %745 = vmatpush1.xpose.msra.mxu0 0.0
    %746 = vmatprep.subr.mxu0 0.0
    %747 = vmatpush1.xpose.msra.mxu0 0.0
    %748 = vmatprep.subr.mxu0 0.0
    %749 = vmatpush1.xpose.msra.mxu0 0.0
    %750 = vmatprep.subr.mxu0 0.0
    %751 = vmatpush1.xpose.msra.mxu0 0.0
    %752 = vmatprep.subr.mxu0 0.0
    %753 = vmatpush1.xpose.msra.mxu0 0.0
    %754 = vmatprep.subr.mxu0 0.0
    %755 = vmatpush1.xpose.msra.mxu0 0.0
    %756 = vmatprep.subr.mxu0 0.0
    %757 = vmatpush1.xpose.msra.mxu0 0.0
    %758 = vmatprep.subr.mxu0 0.0
    %759 = vmatpush1.xpose.msra.mxu0 0.0
    %760 = vmatprep.subr.mxu0 0.0
    %761 = vmatpush1.xpose.msra.mxu0 0.0
    %762 = vmatprep.subr.mxu0 0.0
    %763 = vmatpush1.xpose.msra.mxu0 0.0
    %764 = vmatprep.subr.mxu0 0.0
    %765 = vmatpush1.xpose.msra.mxu0 0.0
    %766 = vmatprep.subr.mxu0 0.0
    %767 = vmatpush1.xpose.msra.mxu0 0.0
    %768 = vmatprep.subr.mxu0 0.0
    %769 = vmatpush1.xpose.msra.mxu0 0.0
    %770 = vmatprep.subr.mxu0 0.0
    %771 = vmatpush1.xpose.msra.mxu0 0.0
    %772 = vmatprep.subr.mxu0 0.0
    %773 = vmatpush1.xpose.msra.mxu0 0.0
    %774 = vmatprep.mubr.f32.mxu0 0.0
    %v775 = vand.u32 %v478, 4294901760
    %v776 = vsub.f32 %v478, %v775
    %v777 = vand.u32 %v776, 4294901760
    %778 = vmatmul.mubr.f32.gmra.mrb[0].mxu0 %v777
    %v779 = vpop.f32.mrb[0].mxu0
    %v780 = vadd.f32 %v706, %v779
    %v781 = vpop.f32.mrb[0].mxu0
    %782 = vdwg.mxu0
    %783 = vmatprep.subr.mxu0 0.0
    %v784 = vand.u32 %v481, 4294901760
    %v785 = vsub.f32 %v481, %v784
    %v786 = vand.u32 %v785, 4294901760
    %787 = vmatpush1.xpose.msra.mxu0 %v786
    %788 = vmatprep.subr.mxu0 0.0
    %789 = vmatpush1.xpose.msra.mxu0 0.0
    %790 = vmatprep.subr.mxu0 0.0
    %791 = vmatpush1.xpose.msra.mxu0 0.0
    %792 = vmatprep.subr.mxu0 0.0
    %793 = vmatpush1.xpose.msra.mxu0 0.0
    %794 = vmatprep.subr.mxu0 0.0
    %795 = vmatpush1.xpose.msra.mxu0 0.0
    %796 = vmatprep.subr.mxu0 0.0
    %797 = vmatpush1.xpose.msra.mxu0 0.0
    %798 = vmatprep.subr.mxu0 0.0
    %799 = vmatpush1.xpose.msra.mxu0 0.0
    %800 = vmatprep.subr.mxu0 0.0
    %801 = vmatpush1.xpose.msra.mxu0 0.0
    %802 = vmatprep.subr.mxu0 0.0
    %803 = vmatpush1.xpose.msra.mxu0 0.0
    %804 = vmatprep.subr.mxu0 0.0
    %805 = vmatpush1.xpose.msra.mxu0 0.0
    %806 = vmatprep.subr.mxu0 0.0
    %807 = vmatpush1.xpose.msra.mxu0 0.0
    %808 = vmatprep.subr.mxu0 0.0
    %809 = vmatpush1.xpose.msra.mxu0 0.0
    %810 = vmatprep.subr.mxu0 0.0
    %811 = vmatpush1.xpose.msra.mxu0 0.0
    %812 = vmatprep.subr.mxu0 0.0
    %813 = vmatpush1.xpose.msra.mxu0 0.0
    %814 = vmatprep.subr.mxu0 0.0
    %815 = vmatpush1.xpose.msra.mxu0 0.0
    %816 = vmatprep.subr.mxu0 0.0
    %817 = vmatpush1.xpose.msra.mxu0 0.0
    %818 = vmatprep.subr.mxu0 0.0
    %819 = vmatpush1.xpose.msra.mxu0 0.0
    %820 = vmatprep.subr.mxu0 0.0
    %821 = vmatpush1.xpose.msra.mxu0 0.0
    %822 = vmatprep.subr.mxu0 0.0
    %823 = vmatpush1.xpose.msra.mxu0 0.0
    %824 = vmatprep.subr.mxu0 0.0
    %825 = vmatpush1.xpose.msra.mxu0 0.0
    %826 = vmatprep.subr.mxu0 0.0
    %827 = vmatpush1.xpose.msra.mxu0 0.0
    %828 = vmatprep.subr.mxu0 0.0
    %829 = vmatpush1.xpose.msra.mxu0 0.0
    %830 = vmatprep.subr.mxu0 0.0
    %831 = vmatpush1.xpose.msra.mxu0 0.0
    %832 = vmatprep.subr.mxu0 0.0
    %833 = vmatpush1.xpose.msra.mxu0 0.0
    %834 = vmatprep.subr.mxu0 0.0
    %835 = vmatpush1.xpose.msra.mxu0 0.0
    %836 = vmatprep.subr.mxu0 0.0
    %837 = vmatpush1.xpose.msra.mxu0 0.0
    %838 = vmatprep.subr.mxu0 0.0
    %839 = vmatpush1.xpose.msra.mxu0 0.0
    %840 = vmatprep.subr.mxu0 0.0
    %841 = vmatpush1.xpose.msra.mxu0 0.0
    %842 = vmatprep.subr.mxu0 0.0
    %843 = vmatpush1.xpose.msra.mxu0 0.0
    %844 = vmatprep.subr.mxu0 0.0
    %845 = vmatpush1.xpose.msra.mxu0 0.0
    %846 = vmatprep.subr.mxu0 0.0
    %847 = vmatpush1.xpose.msra.mxu0 0.0
    %848 = vmatprep.subr.mxu0 0.0
    %849 = vmatpush1.xpose.msra.mxu0 0.0
    %850 = vmatprep.mubr.f32.mxu0 0.0
    %v851 = vand.u32 %v478, 4294901760
    %852 = vmatmul.mubr.f32.gmra.mrb[0].mxu0 %v851
    %v853 = vpop.f32.mrb[0].mxu0
    %v854 = vadd.f32 %v780, %v853
    %v855 = vpop.f32.mrb[0].mxu0
    %856 = vdwg.mxu0
    %857 = vmatprep.subr.mxu0 0.0
    %v858 = vand.u32 %v481, 4294901760
    %859 = vmatpush1.xpose.msra.mxu0 %v858
    %860 = vmatprep.subr.mxu0 0.0
    %861 = vmatpush1.xpose.msra.mxu0 0.0
    %862 = vmatprep.subr.mxu0 0.0
    %863 = vmatpush1.xpose.msra.mxu0 0.0
    %864 = vmatprep.subr.mxu0 0.0
    %865 = vmatpush1.xpose.msra.mxu0 0.0
    %866 = vmatprep.subr.mxu0 0.0
    %867 = vmatpush1.xpose.msra.mxu0 0.0
    %868 = vmatprep.subr.mxu0 0.0
    %869 = vmatpush1.xpose.msra.mxu0 0.0
    %870 = vmatprep.subr.mxu0 0.0
    %871 = vmatpush1.xpose.msra.mxu0 0.0
    %872 = vmatprep.subr.mxu0 0.0
    %873 = vmatpush1.xpose.msra.mxu0 0.0
    %874 = vmatprep.subr.mxu0 0.0
    %875 = vmatpush1.xpose.msra.mxu0 0.0
    %876 = vmatprep.subr.mxu0 0.0
    %877 = vmatpush1.xpose.msra.mxu0 0.0
    %878 = vmatprep.subr.mxu0 0.0
    %879 = vmatpush1.xpose.msra.mxu0 0.0
    %880 = vmatprep.subr.mxu0 0.0
    %881 = vmatpush1.xpose.msra.mxu0 0.0
    %882 = vmatprep.subr.mxu0 0.0
    %883 = vmatpush1.xpose.msra.mxu0 0.0
    %884 = vmatprep.subr.mxu0 0.0
    %885 = vmatpush1.xpose.msra.mxu0 0.0
    %886 = vmatprep.subr.mxu0 0.0
    %887 = vmatpush1.xpose.msra.mxu0 0.0
    %888 = vmatprep.subr.mxu0 0.0
    %889 = vmatpush1.xpose.msra.mxu0 0.0
    %890 = vmatprep.subr.mxu0 0.0
    %891 = vmatpush1.xpose.msra.mxu0 0.0
    %892 = vmatprep.subr.mxu0 0.0
    %893 = vmatpush1.xpose.msra.mxu0 0.0
    %894 = vmatprep.subr.mxu0 0.0
    %895 = vmatpush1.xpose.msra.mxu0 0.0
    %896 = vmatprep.subr.mxu0 0.0
    %897 = vmatpush1.xpose.msra.mxu0 0.0
    %898 = vmatprep.subr.mxu0 0.0
    %899 = vmatpush1.xpose.msra.mxu0 0.0
    %900 = vmatprep.subr.mxu0 0.0
    %901 = vmatpush1.xpose.msra.mxu0 0.0
    %902 = vmatprep.subr.mxu0 0.0
    %903 = vmatpush1.xpose.msra.mxu0 0.0
    %904 = vmatprep.subr.mxu0 0.0
    %905 = vmatpush1.xpose.msra.mxu0 0.0
    %906 = vmatprep.subr.mxu0 0.0
    %907 = vmatpush1.xpose.msra.mxu0 0.0
    %908 = vmatprep.subr.mxu0 0.0
    %909 = vmatpush1.xpose.msra.mxu0 0.0
    %910 = vmatprep.subr.mxu0 0.0
    %911 = vmatpush1.xpose.msra.mxu0 0.0
    %912 = vmatprep.subr.mxu0 0.0
    %913 = vmatpush1.xpose.msra.mxu0 0.0
    %914 = vmatprep.subr.mxu0 0.0
    %915 = vmatpush1.xpose.msra.mxu0 0.0
    %916 = vmatprep.subr.mxu0 0.0
    %917 = vmatpush1.xpose.msra.mxu0 0.0
    %918 = vmatprep.subr.mxu0 0.0
    %919 = vmatpush1.xpose.msra.mxu0 0.0
    %920 = vmatprep.subr.mxu0 0.0
    %921 = vmatpush1.xpose.msra.mxu0 0.0
    %922 = vmatprep.mubr.f32.mxu0 0.0
    %v923 = vand.u32 %v478, 4294901760
    %924 = vmatmul.mubr.f32.gmra.mrb[0].mxu0 %v923
    %v925 = vpop.f32.mrb[0].mxu0
    %v926 = vadd.f32 %v854, %v925
    %v927 = vpop.f32.mrb[0].mxu0
    %928 = vdwg.mxu0
    %vm929 = vcmask 64512
    %v930 = vsel %vm929, %v474, -inf
    %931 = vmax.xlane.f32.xlu0 %v930
    %v932 = vpop.xlane.xlu0 %931
    %v933 = vsel %vm929, %v926, -inf
    %934 = vmax.xlane.f32.xlu0 %v933
    %v935 = vpop.xlane.xlu0 %934
    %v936 = vsub.f32 %v474, %v932
    %v937 = vsub.f32 %v926, %v935
    %v938 = vmul.f32 %v936, 1.442695
    %v939 = vpow.pop %v938
    %v940 = vmul.f32 %v937, 1.442695
    %v941 = vpow.pop %v940
    %v942 = vsel %vm929, %v939, 0.0
    %943 = vadd.xlane.f32.xlu0 %v942
    %v944 = vpop.xlane.xlu0 %943
    %v945 = vsel %vm929, %v941, 0.0
    %946 = vadd.xlane.f32.xlu0 %v945
    %v947 = vpop.xlane.xlu0 %946
    %v948 = vrcp.pop %v944
    %v949 = vmul.f32 1.0, %v948
    %v950 = vrcp.pop %v947
    %v951 = vmul.f32 1.0, %v950
    %v952 = vmul.f32 %v939, %v949
    %v953 = vmul.f32 %v941, %v951
    %954 = vst.msk [vmem:[#allocation4] sm:$0xff] %vm929, %v952
    %955 = vst.msk [vmem:[#allocation4 + $0x8] sm:$0xff] %vm929, %v953
    %v957 = vsel %vm929, %v952, 0
    %959 = vmatprep.subr.mxu0 0.0
    %v960 = vand.u32 %v22, 4294901760
    %961 = vmatpush1.msra.mxu0 %v960
    %962 = vmatprep.subr.mxu0 0.0
    %963 = vmatpush1.msra.mxu0 0.0
    %964 = vmatprep.subr.mxu0 0.0
    %965 = vmatpush1.msra.mxu0 0.0
    %966 = vmatprep.subr.mxu0 0.0
    %967 = vmatpush1.msra.mxu0 0.0
    %968 = vmatprep.subr.mxu0 0.0
    %969 = vmatpush1.msra.mxu0 0.0
    %970 = vmatprep.subr.mxu0 0.0
    %971 = vmatpush1.msra.mxu0 0.0
    %972 = vmatprep.subr.mxu0 0.0
    %973 = vmatpush1.msra.mxu0 0.0
    %974 = vmatprep.subr.mxu0 0.0
    %975 = vmatpush1.msra.mxu0 0.0
    %976 = vmatprep.subr.mxu0 0.0
    %977 = vmatpush1.msra.mxu0 0.0
    %978 = vmatprep.subr.mxu0 0.0
    %979 = vmatpush1.msra.mxu0 0.0
    %980 = vmatprep.subr.mxu0 0.0
    %981 = vmatpush1.msra.mxu0 0.0
    %982 = vmatprep.subr.mxu0 0.0
    %983 = vmatpush1.msra.mxu0 0.0
    %984 = vmatprep.subr.mxu0 0.0
    %985 = vmatpush1.msra.mxu0 0.0
    %986 = vmatprep.subr.mxu0 0.0
    %987 = vmatpush1.msra.mxu0 0.0
    %988 = vmatprep.subr.mxu0 0.0
    %989 = vmatpush1.msra.mxu0 0.0
    %990 = vmatprep.subr.mxu0 0.0
    %991 = vmatpush1.msra.mxu0 0.0
    %992 = vmatprep.subr.mxu0 0.0
    %993 = vmatpush1.msra.mxu0 0.0
    %994 = vmatprep.subr.mxu0 0.0
    %995 = vmatpush1.msra.mxu0 0.0
    %996 = vmatprep.subr.mxu0 0.0
    %997 = vmatpush1.msra.mxu0 0.0
    %998 = vmatprep.subr.mxu0 0.0
    %999 = vmatpush1.msra.mxu0 0.0
    %1000 = vmatprep.subr.mxu0 0.0
    %1001 = vmatpush1.msra.mxu0 0.0
    %1002 = vmatprep.subr.mxu0 0.0
    %1003 = vmatpush1.msra.mxu0 0.0
    %1004 = vmatprep.subr.mxu0 0.0
    %1005 = vmatpush1.msra.mxu0 0.0
    %1006 = vmatprep.subr.mxu0 0.0
    %1007 = vmatpush1.msra.mxu0 0.0
    %1008 = vmatprep.subr.mxu0 0.0
    %1009 = vmatpush1.msra.mxu0 0.0
    %1010 = vmatprep.subr.mxu0 0.0
    %1011 = vmatpush1.msra.mxu0 0.0
    %1012 = vmatprep.subr.mxu0 0.0
    %1013 = vmatpush1.msra.mxu0 0.0
    %1014 = vmatprep.subr.mxu0 0.0
    %1015 = vmatpush1.msra.mxu0 0.0
    %1016 = vmatprep.subr.mxu0 0.0
    %1017 = vmatpush1.msra.mxu0 0.0
    %1018 = vmatprep.subr.mxu0 0.0
    %1019 = vmatpush1.msra.mxu0 0.0
    %1020 = vmatprep.subr.mxu0 0.0
    %1021 = vmatpush1.msra.mxu0 0.0
    %1022 = vmatprep.subr.mxu0 0.0
    %1023 = vmatpush1.msra.mxu0 0.0
    %1024 = vmatprep.mubr.f32.mxu0 0.0
    %v1025 = vand.u32 %v957, 4294901760
    %v1026 = vsub.f32 %v957, %v1025
    %v1027 = vand.u32 %v1026, 4294901760
    %v1028 = vsub.f32 %v1026, %v1027
    %v1029 = vand.u32 %v1028, 4294901760
    %1030 = vmatmul.mubr.f32.gmra.mrb[0].mxu0 %v1029
    %v1031 = vpop.f32.mrb[0].mxu0
    %v1032 = vadd.f32 0.0, %v1031
    %v1033 = vpop.f32.mrb[0].mxu0
    %1034 = vdwg.mxu0
    %1035 = vmatprep.subr.mxu0 0.0
    %v1036 = vand.u32 %v22, 4294901760
    %v1037 = vsub.f32 %v22, %v1036
    %v1038 = vand.u32 %v1037, 4294901760
    %v1039 = vsub.f32 %v1037, %v1038
    %v1040 = vand.u32 %v1039, 4294901760
    %1041 = vmatpush1.msra.mxu0 %v1040
    %1042 = vmatprep.subr.mxu0 0.0
    %1043 = vmatpush1.msra.mxu0 0.0
    %1044 = vmatprep.subr.mxu0 0.0
    %1045 = vmatpush1.msra.mxu0 0.0
    %1046 = vmatprep.subr.mxu0 0.0
    %1047 = vmatpush1.msra.mxu0 0.0
    %1048 = vmatprep.subr.mxu0 0.0
    %1049 = vmatpush1.msra.mxu0 0.0
    %1050 = vmatprep.subr.mxu0 0.0
    %1051 = vmatpush1.msra.mxu0 0.0
    %1052 = vmatprep.subr.mxu0 0.0
    %1053 = vmatpush1.msra.mxu0 0.0
    %1054 = vmatprep.subr.mxu0 0.0
    %1055 = vmatpush1.msra.mxu0 0.0
    %1056 = vmatprep.subr.mxu0 0.0
    %1057 = vmatpush1.msra.mxu0 0.0
    %1058 = vmatprep.subr.mxu0 0.0
    %1059 = vmatpush1.msra.mxu0 0.0
    %1060 = vmatprep.subr.mxu0 0.0
    %1061 = vmatpush1.msra.mxu0 0.0
    %1062 = vmatprep.subr.mxu0 0.0
    %1063 = vmatpush1.msra.mxu0 0.0
    %1064 = vmatprep.subr.mxu0 0.0
    %1065 = vmatpush1.msra.mxu0 0.0
    %1066 = vmatprep.subr.mxu0 0.0
    %1067 = vmatpush1.msra.mxu0 0.0
    %1068 = vmatprep.subr.mxu0 0.0
    %1069 = vmatpush1.msra.mxu0 0.0
    %1070 = vmatprep.subr.mxu0 0.0
    %1071 = vmatpush1.msra.mxu0 0.0
    %1072 = vmatprep.subr.mxu0 0.0
    %1073 = vmatpush1.msra.mxu0 0.0
    %1074 = vmatprep.subr.mxu0 0.0
    %1075 = vmatpush1.msra.mxu0 0.0
    %1076 = vmatprep.subr.mxu0 0.0
    %1077 = vmatpush1.msra.mxu0 0.0
    %1078 = vmatprep.subr.mxu0 0.0
    %1079 = vmatpush1.msra.mxu0 0.0
    %1080 = vmatprep.subr.mxu0 0.0
    %1081 = vmatpush1.msra.mxu0 0.0
    %1082 = vmatprep.subr.mxu0 0.0
    %1083 = vmatpush1.msra.mxu0 0.0
    %1084 = vmatprep.subr.mxu0 0.0
    %1085 = vmatpush1.msra.mxu0 0.0
    %1086 = vmatprep.subr.mxu0 0.0
    %1087 = vmatpush1.msra.mxu0 0.0
    %1088 = vmatprep.subr.mxu0 0.0
    %1089 = vmatpush1.msra.mxu0 0.0
    %1090 = vmatprep.subr.mxu0 0.0
    %1091 = vmatpush1.msra.mxu0 0.0
    %1092 = vmatprep.subr.mxu0 0.0
    %1093 = vmatpush1.msra.mxu0 0.0
    %1094 = vmatprep.subr.mxu0 0.0
    %1095 = vmatpush1.msra.mxu0 0.0
    %1096 = vmatprep.subr.mxu0 0.0
    %1097 = vmatpush1.msra.mxu0 0.0
    %1098 = vmatprep.subr.mxu0 0.0
    %1099 = vmatpush1.msra.mxu0 0.0
    %1100 = vmatprep.subr.mxu0 0.0
    %1101 = vmatpush1.msra.mxu0 0.0
    %1102 = vmatprep.subr.mxu0 0.0
    %1103 = vmatpush1.msra.mxu0 0.0
    %1104 = vmatprep.mubr.f32.mxu0 0.0
    %v1105 = vand.u32 %v957, 4294901760
    %1106 = vmatmul.mubr.f32.gmra.mrb[0].mxu0 %v1105
    %v1107 = vpop.f32.mrb[0].mxu0
    %v1108 = vadd.f32 %v1032, %v1107
    %v1109 = vpop.f32.mrb[0].mxu0
    %1110 = vdwg.mxu0
    %1111 = vmatprep.subr.mxu0 0.0
    %v1112 = vand.u32 %v22, 4294901760
    %v1113 = vsub.f32 %v22, %v1112
    %1114 = vmatpush1.msra.mxu0 %v1113
    %1115 = vmatprep.subr.mxu0 0.0
    %1116 = vmatpush1.msra.mxu0 0.0
    %1117 = vmatprep.subr.mxu0 0.0
    %1118 = vmatpush1.msra.mxu0 0.0
    %1119 = vmatprep.subr.mxu0 0.0
    %1120 = vmatpush1.msra.mxu0 0.0
    %1121 = vmatprep.subr.mxu0 0.0
    %1122 = vmatpush1.msra.mxu0 0.0
    %1123 = vmatprep.subr.mxu0 0.0
    %1124 = vmatpush1.msra.mxu0 0.0
    %1125 = vmatprep.subr.mxu0 0.0
    %1126 = vmatpush1.msra.mxu0 0.0
    %1127 = vmatprep.subr.mxu0 0.0
    %1128 = vmatpush1.msra.mxu0 0.0
    %1129 = vmatprep.subr.mxu0 0.0
    %1130 = vmatpush1.msra.mxu0 0.0
    %1131 = vmatprep.subr.mxu0 0.0
    %1132 = vmatpush1.msra.mxu0 0.0
    %1133 = vmatprep.subr.mxu0 0.0
    %1134 = vmatpush1.msra.mxu0 0.0
    %1135 = vmatprep.subr.mxu0 0.0
    %1136 = vmatpush1.msra.mxu0 0.0
    %1137 = vmatprep.subr.mxu0 0.0
    %1138 = vmatpush1.msra.mxu0 0.0
    %1139 = vmatprep.subr.mxu0 0.0
    %1140 = vmatpush1.msra.mxu0 0.0
    %1141 = vmatprep.subr.mxu0 0.0
    %1142 = vmatpush1.msra.mxu0 0.0
    %1143 = vmatprep.subr.mxu0 0.0
    %1144 = vmatpush1.msra.mxu0 0.0
    %1145 = vmatprep.subr.mxu0 0.0
    %1146 = vmatpush1.msra.mxu0 0.0
    %1147 = vmatprep.subr.mxu0 0.0
    %1148 = vmatpush1.msra.mxu0 0.0
    %1149 = vmatprep.subr.mxu0 0.0
    %1150 = vmatpush1.msra.mxu0 0.0
    %1151 = vmatprep.subr.mxu0 0.0
    %1152 = vmatpush1.msra.mxu0 0.0
    %1153 = vmatprep.subr.mxu0 0.0
    %1154 = vmatpush1.msra.mxu0 0.0
    %1155 = vmatprep.subr.mxu0 0.0
    %1156 = vmatpush1.msra.mxu0 0.0
    %1157 = vmatprep.subr.mxu0 0.0
    %1158 = vmatpush1.msra.mxu0 0.0
    %1159 = vmatprep.subr.mxu0 0.0
    %1160 = vmatpush1.msra.mxu0 0.0
    %1161 = vmatprep.subr.mxu0 0.0
    %1162 = vmatpush1.msra.mxu0 0.0
    %1163 = vmatprep.subr.mxu0 0.0
    %1164 = vmatpush1.msra.mxu0 0.0
    %1165 = vmatprep.subr.mxu0 0.0
    %1166 = vmatpush1.msra.mxu0 0.0
    %1167 = vmatprep.subr.mxu0 0.0
    %1168 = vmatpush1.msra.mxu0 0.0
    %1169 = vmatprep.subr.mxu0 0.0
    %1170 = vmatpush1.msra.mxu0 0.0
    %1171 = vmatprep.subr.mxu0 0.0
    %1172 = vmatpush1.msra.mxu0 0.0
    %1173 = vmatprep.subr.mxu0 0.0
    %1174 = vmatpush1.msra.mxu0 0.0
    %1175 = vmatprep.subr.mxu0 0.0
    %1176 = vmatpush1.msra.mxu0 0.0
    %1177 = vmatprep.mubr.f32.mxu0 0.0
    %v1178 = vand.u32 %v957, 4294901760
    %v1179 = vsub.f32 %v957, %v1178
    %1180 = vmatmul.mubr.f32.gmra.mrb[0].mxu0 %v1179
    %v1181 = vpop.f32.mrb[0].mxu0
    %v1182 = vadd.f32 %v1108, %v1181
    %v1183 = vpop.f32.mrb[0].mxu0
    %1184 = vdwg.mxu0
    %1185 = vmatprep.subr.mxu0 0.0
    %v1186 = vand.u32 %v22, 4294901760
    %1187 = vmatpush1.msra.mxu0 %v1186
    %1188 = vmatprep.subr.mxu0 0.0
    %1189 = vmatpush1.msra.mxu0 0.0
    %1190 = vmatprep.subr.mxu0 0.0
    %1191 = vmatpush1.msra.mxu0 0.0
    %1192 = vmatprep.subr.mxu0 0.0
    %1193 = vmatpush1.msra.mxu0 0.0
    %1194 = vmatprep.subr.mxu0 0.0
    %1195 = vmatpush1.msra.mxu0 0.0
    %1196 = vmatprep.subr.mxu0 0.0
    %1197 = vmatpush1.msra.mxu0 0.0
    %1198 = vmatprep.subr.mxu0 0.0
    %1199 = vmatpush1.msra.mxu0 0.0
    %1200 = vmatprep.subr.mxu0 0.0
    %1201 = vmatpush1.msra.mxu0 0.0
    %1202 = vmatprep.subr.mxu0 0.0
    %1203 = vmatpush1.msra.mxu0 0.0
    %1204 = vmatprep.subr.mxu0 0.0
    %1205 = vmatpush1.msra.mxu0 0.0
    %1206 = vmatprep.subr.mxu0 0.0
    %1207 = vmatpush1.msra.mxu0 0.0
    %1208 = vmatprep.subr.mxu0 0.0
    %1209 = vmatpush1.msra.mxu0 0.0
    %1210 = vmatprep.subr.mxu0 0.0
    %1211 = vmatpush1.msra.mxu0 0.0
    %1212 = vmatprep.subr.mxu0 0.0
    %1213 = vmatpush1.msra.mxu0 0.0
    %1214 = vmatprep.subr.mxu0 0.0
    %1215 = vmatpush1.msra.mxu0 0.0
    %1216 = vmatprep.subr.mxu0 0.0
    %1217 = vmatpush1.msra.mxu0 0.0
    %1218 = vmatprep.subr.mxu0 0.0
    %1219 = vmatpush1.msra.mxu0 0.0
    %1220 = vmatprep.subr.mxu0 0.0
    %1221 = vmatpush1.msra.mxu0 0.0
    %1222 = vmatprep.subr.mxu0 0.0
    %1223 = vmatpush1.msra.mxu0 0.0
    %1224 = vmatprep.subr.mxu0 0.0
    %1225 = vmatpush1.msra.mxu0 0.0
    %1226 = vmatprep.subr.mxu0 0.0
    %1227 = vmatpush1.msra.mxu0 0.0
    %1228 = vmatprep.subr.mxu0 0.0
    %1229 = vmatpush1.msra.mxu0 0.0
    %1230 = vmatprep.subr.mxu0 0.0
    %1231 = vmatpush1.msra.mxu0 0.0
    %1232 = vmatprep.subr.mxu0 0.0
    %1233 = vmatpush1.msra.mxu0 0.0
    %1234 = vmatprep.subr.mxu0 0.0
    %1235 = vmatpush1.msra.mxu0 0.0
    %1236 = vmatprep.subr.mxu0 0.0
    %1237 = vmatpush1.msra.mxu0 0.0
    %1238 = vmatprep.subr.mxu0 0.0
    %1239 = vmatpush1.msra.mxu0 0.0
    %1240 = vmatprep.subr.mxu0 0.0
    %1241 = vmatpush1.msra.mxu0 0.0
    %1242 = vmatprep.subr.mxu0 0.0
    %1243 = vmatpush1.msra.mxu0 0.0
    %1244 = vmatprep.subr.mxu0 0.0
    %1245 = vmatpush1.msra.mxu0 0.0
    %1246 = vmatprep.subr.mxu0 0.0
    %1247 = vmatpush1.msra.mxu0 0.0
    %1248 = vmatprep.subr.mxu0 0.0
    %1249 = vmatpush1.msra.mxu0 0.0
    %1250 = vmatprep.mubr.f32.mxu0 0.0
    %v1251 = vand.u32 %v957, 4294901760
    %v1252 = vsub.f32 %v957, %v1251
    %v1253 = vand.u32 %v1252, 4294901760
    %1254 = vmatmul.mubr.f32.gmra.mrb[0].mxu0 %v1253
    %v1255 = vpop.f32.mrb[0].mxu0
    %v1256 = vadd.f32 %v1182, %v1255
    %v1257 = vpop.f32.mrb[0].mxu0
    %1258 = vdwg.mxu0
    %1259 = vmatprep.subr.mxu0 0.0
    %v1260 = vand.u32 %v22, 4294901760
    %v1261 = vsub.f32 %v22, %v1260
    %v1262 = vand.u32 %v1261, 4294901760
    %1263 = vmatpush1.msra.mxu0 %v1262
    %1264 = vmatprep.subr.mxu0 0.0
    %1265 = vmatpush1.msra.mxu0 0.0
    %1266 = vmatprep.subr.mxu0 0.0
    %1267 = vmatpush1.msra.mxu0 0.0
    %1268 = vmatprep.subr.mxu0 0.0
    %1269 = vmatpush1.msra.mxu0 0.0
    %1270 = vmatprep.subr.mxu0 0.0
    %1271 = vmatpush1.msra.mxu0 0.0
    %1272 = vmatprep.subr.mxu0 0.0
    %1273 = vmatpush1.msra.mxu0 0.0
    %1274 = vmatprep.subr.mxu0 0.0
    %1275 = vmatpush1.msra.mxu0 0.0
    %1276 = vmatprep.subr.mxu0 0.0
    %1277 = vmatpush1.msra.mxu0 0.0
    %1278 = vmatprep.subr.mxu0 0.0
    %1279 = vmatpush1.msra.mxu0 0.0
    %1280 = vmatprep.subr.mxu0 0.0
    %1281 = vmatpush1.msra.mxu0 0.0
    %1282 = vmatprep.subr.mxu0 0.0
    %1283 = vmatpush1.msra.mxu0 0.0
    %1284 = vmatprep.subr.mxu0 0.0
    %1285 = vmatpush1.msra.mxu0 0.0
    %1286 = vmatprep.subr.mxu0 0.0
    %1287 = vmatpush1.msra.mxu0 0.0
    %1288 = vmatprep.subr.mxu0 0.0
    %1289 = vmatpush1.msra.mxu0 0.0
    %1290 = vmatprep.subr.mxu0 0.0
    %1291 = vmatpush1.msra.mxu0 0.0
    %1292 = vmatprep.subr.mxu0 0.0
    %1293 = vmatpush1.msra.mxu0 0.0
    %1294 = vmatprep.subr.mxu0 0.0
    %1295 = vmatpush1.msra.mxu0 0.0
    %1296 = vmatprep.subr.mxu0 0.0
    %1297 = vmatpush1.msra.mxu0 0.0
    %1298 = vmatprep.subr.mxu0 0.0
    %1299 = vmatpush1.msra.mxu0 0.0
    %1300 = vmatprep.subr.mxu0 0.0
    %1301 = vmatpush1.msra.mxu0 0.0
    %1302 = vmatprep.subr.mxu0 0.0
    %1303 = vmatpush1.msra.mxu0 0.0
    %1304 = vmatprep.subr.mxu0 0.0
    %1305 = vmatpush1.msra.mxu0 0.0
    %1306 = vmatprep.subr.mxu0 0.0
    %1307 = vmatpush1.msra.mxu0 0.0
    %1308 = vmatprep.subr.mxu0 0.0
    %1309 = vmatpush1.msra.mxu0 0.0
    %1310 = vmatprep.subr.mxu0 0.0
    %1311 = vmatpush1.msra.mxu0 0.0
    %1312 = vmatprep.subr.mxu0 0.0
    %1313 = vmatpush1.msra.mxu0 0.0
    %1314 = vmatprep.subr.mxu0 0.0
    %1315 = vmatpush1.msra.mxu0 0.0
    %1316 = vmatprep.subr.mxu0 0.0
    %1317 = vmatpush1.msra.mxu0 0.0
    %1318 = vmatprep.subr.mxu0 0.0
    %1319 = vmatpush1.msra.mxu0 0.0
    %1320 = vmatprep.subr.mxu0 0.0
    %1321 = vmatpush1.msra.mxu0 0.0
    %1322 = vmatprep.subr.mxu0 0.0
    %1323 = vmatpush1.msra.mxu0 0.0
    %1324 = vmatprep.subr.mxu0 0.0
    %1325 = vmatpush1.msra.mxu0 0.0
    %1326 = vmatprep.mubr.f32.mxu0 0.0
    %v1327 = vand.u32 %v957, 4294901760
    %1328 = vmatmul.mubr.f32.gmra.mrb[0].mxu0 %v1327
    %v1329 = vpop.f32.mrb[0].mxu0
    %v1330 = vadd.f32 %v1256, %v1329
    %v1331 = vpop.f32.mrb[0].mxu0
    %1332 = vdwg.mxu0
    %1333 = vmatprep.subr.mxu0 0.0
    %v1334 = vand.u32 %v22, 4294901760
    %1335 = vmatpush1.msra.mxu0 %v1334
    %1336 = vmatprep.subr.mxu0 0.0
    %1337 = vmatpush1.msra.mxu0 0.0
    %1338 = vmatprep.subr.mxu0 0.0
    %1339 = vmatpush1.msra.mxu0 0.0
    %1340 = vmatprep.subr.mxu0 0.0
    %1341 = vmatpush1.msra.mxu0 0.0
    %1342 = vmatprep.subr.mxu0 0.0
    %1343 = vmatpush1.msra.mxu0 0.0
    %1344 = vmatprep.subr.mxu0 0.0
    %1345 = vmatpush1.msra.mxu0 0.0
    %1346 = vmatprep.subr.mxu0 0.0
    %1347 = vmatpush1.msra.mxu0 0.0
    %1348 = vmatprep.subr.mxu0 0.0
    %1349 = vmatpush1.msra.mxu0 0.0
    %1350 = vmatprep.subr.mxu0 0.0
    %1351 = vmatpush1.msra.mxu0 0.0
    %1352 = vmatprep.subr.mxu0 0.0
    %1353 = vmatpush1.msra.mxu0 0.0
    %1354 = vmatprep.subr.mxu0 0.0
    %1355 = vmatpush1.msra.mxu0 0.0
    %1356 = vmatprep.subr.mxu0 0.0
    %1357 = vmatpush1.msra.mxu0 0.0
    %1358 = vmatprep.subr.mxu0 0.0
    %1359 = vmatpush1.msra.mxu0 0.0
    %1360 = vmatprep.subr.mxu0 0.0
    %1361 = vmatpush1.msra.mxu0 0.0
    %1362 = vmatprep.subr.mxu0 0.0
    %1363 = vmatpush1.msra.mxu0 0.0
    %1364 = vmatprep.subr.mxu0 0.0
    %1365 = vmatpush1.msra.mxu0 0.0
    %1366 = vmatprep.subr.mxu0 0.0
    %1367 = vmatpush1.msra.mxu0 0.0
    %1368 = vmatprep.subr.mxu0 0.0
    %1369 = vmatpush1.msra.mxu0 0.0
    %1370 = vmatprep.subr.mxu0 0.0
    %1371 = vmatpush1.msra.mxu0 0.0
    %1372 = vmatprep.subr.mxu0 0.0
    %1373 = vmatpush1.msra.mxu0 0.0
    %1374 = vmatprep.subr.mxu0 0.0
    %1375 = vmatpush1.msra.mxu0 0.0
    %1376 = vmatprep.subr.mxu0 0.0
    %1377 = vmatpush1.msra.mxu0 0.0
    %1378 = vmatprep.subr.mxu0 0.0
    %1379 = vmatpush1.msra.mxu0 0.0
    %1380 = vmatprep.subr.mxu0 0.0
    %1381 = vmatpush1.msra.mxu0 0.0
    %1382 = vmatprep.subr.mxu0 0.0
    %1383 = vmatpush1.msra.mxu0 0.0
    %1384 = vmatprep.subr.mxu0 0.0
    %1385 = vmatpush1.msra.mxu0 0.0
    %1386 = vmatprep.subr.mxu0 0.0
    %1387 = vmatpush1.msra.mxu0 0.0
    %1388 = vmatprep.subr.mxu0 0.0
    %1389 = vmatpush1.msra.mxu0 0.0
    %1390 = vmatprep.subr.mxu0 0.0
    %1391 = vmatpush1.msra.mxu0 0.0
    %1392 = vmatprep.subr.mxu0 0.0
    %1393 = vmatpush1.msra.mxu0 0.0
    %1394 = vmatprep.subr.mxu0 0.0
    %1395 = vmatpush1.msra.mxu0 0.0
    %1396 = vmatprep.subr.mxu0 0.0
    %1397 = vmatpush1.msra.mxu0 0.0
    %1398 = vmatprep.mubr.f32.mxu0 0.0
    %v1399 = vand.u32 %v957, 4294901760
    %1400 = vmatmul.mubr.f32.gmra.mrb[0].mxu0 %v1399
    %v1401 = vpop.f32.mrb[0].mxu0
    %v1402 = vadd.f32 %v1330, %v1401
    %v1403 = vpop.f32.mrb[0].mxu0
    %1404 = vdwg.mxu0
    %v1406 = vsel %vm929, %v953, 0
    %1408 = vmatprep.subr.mxu0 0.0
    %v1409 = vand.u32 %v23, 4294901760
    %1410 = vmatpush1.msra.mxu0 %v1409
    %1411 = vmatprep.subr.mxu0 0.0
    %1412 = vmatpush1.msra.mxu0 0.0
    %1413 = vmatprep.subr.mxu0 0.0
    %1414 = vmatpush1.msra.mxu0 0.0
    %1415 = vmatprep.subr.mxu0 0.0
    %1416 = vmatpush1.msra.mxu0 0.0
    %1417 = vmatprep.subr.mxu0 0.0
    %1418 = vmatpush1.msra.mxu0 0.0
    %1419 = vmatprep.subr.mxu0 0.0
    %1420 = vmatpush1.msra.mxu0 0.0
    %1421 = vmatprep.subr.mxu0 0.0
    %1422 = vmatpush1.msra.mxu0 0.0
    %1423 = vmatprep.subr.mxu0 0.0
    %1424 = vmatpush1.msra.mxu0 0.0
    %1425 = vmatprep.subr.mxu0 0.0
    %1426 = vmatpush1.msra.mxu0 0.0
    %1427 = vmatprep.subr.mxu0 0.0
    %1428 = vmatpush1.msra.mxu0 0.0
    %1429 = vmatprep.subr.mxu0 0.0
    %1430 = vmatpush1.msra.mxu0 0.0
    %1431 = vmatprep.subr.mxu0 0.0
    %1432 = vmatpush1.msra.mxu0 0.0
    %1433 = vmatprep.subr.mxu0 0.0
    %1434 = vmatpush1.msra.mxu0 0.0
    %1435 = vmatprep.subr.mxu0 0.0
    %1436 = vmatpush1.msra.mxu0 0.0
    %1437 = vmatprep.subr.mxu0 0.0
    %1438 = vmatpush1.msra.mxu0 0.0
    %1439 = vmatprep.subr.mxu0 0.0
    %1440 = vmatpush1.msra.mxu0 0.0
    %1441 = vmatprep.subr.mxu0 0.0
    %1442 = vmatpush1.msra.mxu0 0.0
    %1443 = vmatprep.subr.mxu0 0.0
    %1444 = vmatpush1.msra.mxu0 0.0
    %1445 = vmatprep.subr.mxu0 0.0
    %1446 = vmatpush1.msra.mxu0 0.0
    %1447 = vmatprep.subr.mxu0 0.0
    %1448 = vmatpush1.msra.mxu0 0.0
    %1449 = vmatprep.subr.mxu0 0.0
    %1450 = vmatpush1.msra.mxu0 0.0
    %1451 = vmatprep.subr.mxu0 0.0
    %1452 = vmatpush1.msra.mxu0 0.0
    %1453 = vmatprep.subr.mxu0 0.0
    %1454 = vmatpush1.msra.mxu0 0.0
    %1455 = vmatprep.subr.mxu0 0.0
    %1456 = vmatpush1.msra.mxu0 0.0
    %1457 = vmatprep.subr.mxu0 0.0
    %1458 = vmatpush1.msra.mxu0 0.0
    %1459 = vmatprep.subr.mxu0 0.0
    %1460 = vmatpush1.msra.mxu0 0.0
    %1461 = vmatprep.subr.mxu0 0.0
    %1462 = vmatpush1.msra.mxu0 0.0
    %1463 = vmatprep.subr.mxu0 0.0
    %1464 = vmatpush1.msra.mxu0 0.0
    %1465 = vmatprep.subr.mxu0 0.0
    %1466 = vmatpush1.msra.mxu0 0.0
    %1467 = vmatprep.subr.mxu0 0.0
    %1468 = vmatpush1.msra.mxu0 0.0
    %1469 = vmatprep.subr.mxu0 0.0
    %1470 = vmatpush1.msra.mxu0 0.0
    %1471 = vmatprep.subr.mxu0 0.0
    %1472 = vmatpush1.msra.mxu0 0.0
    %1473 = vmatprep.mubr.f32.mxu0 0.0
    %v1474 = vand.u32 %v1406, 4294901760
    %v1475 = vsub.f32 %v1406, %v1474
    %v1476 = vand.u32 %v1475, 4294901760
    %v1477 = vsub.f32 %v1475, %v1476
    %v1478 = vand.u32 %v1477, 4294901760
    %1479 = vmatmul.mubr.f32.gmra.mrb[0].mxu0 %v1478
    %v1480 = vpop.f32.mrb[0].mxu0
    %v1481 = vadd.f32 0.0, %v1480
    %v1482 = vpop.f32.mrb[0].mxu0
    %1483 = vdwg.mxu0
    %1484 = vmatprep.subr.mxu0 0.0
    %v1485 = vand.u32 %v23, 4294901760
    %v1486 = vsub.f32 %v23, %v1485
    %v1487 = vand.u32 %v1486, 4294901760
    %v1488 = vsub.f32 %v1486, %v1487
    %v1489 = vand.u32 %v1488, 4294901760
    %1490 = vmatpush1.msra.mxu0 %v1489
    %1491 = vmatprep.subr.mxu0 0.0
    %1492 = vmatpush1.msra.mxu0 0.0
    %1493 = vmatprep.subr.mxu0 0.0
    %1494 = vmatpush1.msra.mxu0 0.0
    %1495 = vmatprep.subr.mxu0 0.0
    %1496 = vmatpush1.msra.mxu0 0.0
    %1497 = vmatprep.subr.mxu0 0.0
    %1498 = vmatpush1.msra.mxu0 0.0
    %1499 = vmatprep.subr.mxu0 0.0
    %1500 = vmatpush1.msra.mxu0 0.0
    %1501 = vmatprep.subr.mxu0 0.0
    %1502 = vmatpush1.msra.mxu0 0.0
    %1503 = vmatprep.subr.mxu0 0.0
    %1504 = vmatpush1.msra.mxu0 0.0
    %1505 = vmatprep.subr.mxu0 0.0
    %1506 = vmatpush1.msra.mxu0 0.0
    %1507 = vmatprep.subr.mxu0 0.0
    %1508 = vmatpush1.msra.mxu0 0.0
    %1509 = vmatprep.subr.mxu0 0.0
    %1510 = vmatpush1.msra.mxu0 0.0
    %1511 = vmatprep.subr.mxu0 0.0
    %1512 = vmatpush1.msra.mxu0 0.0
    %1513 = vmatprep.subr.mxu0 0.0
    %1514 = vmatpush1.msra.mxu0 0.0
    %1515 = vmatprep.subr.mxu0 0.0
    %1516 = vmatpush1.msra.mxu0 0.0
    %1517 = vmatprep.subr.mxu0 0.0
    %1518 = vmatpush1.msra.mxu0 0.0
    %1519 = vmatprep.subr.mxu0 0.0
    %1520 = vmatpush1.msra.mxu0 0.0
    %1521 = vmatprep.subr.mxu0 0.0
    %1522 = vmatpush1.msra.mxu0 0.0
    %1523 = vmatprep.subr.mxu0 0.0
    %1524 = vmatpush1.msra.mxu0 0.0
    %1525 = vmatprep.subr.mxu0 0.0
    %1526 = vmatpush1.msra.mxu0 0.0
    %1527 = vmatprep.subr.mxu0 0.0
    %1528 = vmatpush1.msra.mxu0 0.0
    %1529 = vmatprep.subr.mxu0 0.0
    %1530 = vmatpush1.msra.mxu0 0.0
    %1531 = vmatprep.subr.mxu0 0.0
    %1532 = vmatpush1.msra.mxu0 0.0
    %1533 = vmatprep.subr.mxu0 0.0
    %1534 = vmatpush1.msra.mxu0 0.0
    %1535 = vmatprep.subr.mxu0 0.0
    %1536 = vmatpush1.msra.mxu0 0.0
    %1537 = vmatprep.subr.mxu0 0.0
    %1538 = vmatpush1.msra.mxu0 0.0
    %1539 = vmatprep.subr.mxu0 0.0
    %1540 = vmatpush1.msra.mxu0 0.0
    %1541 = vmatprep.subr.mxu0 0.0
    %1542 = vmatpush1.msra.mxu0 0.0
    %1543 = vmatprep.subr.mxu0 0.0
    %1544 = vmatpush1.msra.mxu0 0.0
    %1545 = vmatprep.subr.mxu0 0.0
    %1546 = vmatpush1.msra.mxu0 0.0
    %1547 = vmatprep.subr.mxu0 0.0
    %1548 = vmatpush1.msra.mxu0 0.0
    %1549 = vmatprep.subr.mxu0 0.0
    %1550 = vmatpush1.msra.mxu0 0.0
    %1551 = vmatprep.subr.mxu0 0.0
    %1552 = vmatpush1.msra.mxu0 0.0
    %1553 = vmatprep.mubr.f32.mxu0 0.0
    %v1554 = vand.u32 %v1406, 4294901760
    %1555 = vmatmul.mubr.f32.gmra.mrb[0].mxu0 %v1554
    %v1556 = vpop.f32.mrb[0].mxu0
    %v1557 = vadd.f32 %v1481, %v1556
    %v1558 = vpop.f32.mrb[0].mxu0
    %1559 = vdwg.mxu0
    %1560 = vmatprep.subr.mxu0 0.0
    %v1561 = vand.u32 %v23, 4294901760
    %v1562 = vsub.f32 %v23, %v1561
    %1563 = vmatpush1.msra.mxu0 %v1562
    %1564 = vmatprep.subr.mxu0 0.0
    %1565 = vmatpush1.msra.mxu0 0.0
    %1566 = vmatprep.subr.mxu0 0.0
    %1567 = vmatpush1.msra.mxu0 0.0
    %1568 = vmatprep.subr.mxu0 0.0
    %1569 = vmatpush1.msra.mxu0 0.0
    %1570 = vmatprep.subr.mxu0 0.0
    %1571 = vmatpush1.msra.mxu0 0.0
    %1572 = vmatprep.subr.mxu0 0.0
    %1573 = vmatpush1.msra.mxu0 0.0
    %1574 = vmatprep.subr.mxu0 0.0
    %1575 = vmatpush1.msra.mxu0 0.0
    %1576 = vmatprep.subr.mxu0 0.0
    %1577 = vmatpush1.msra.mxu0 0.0
    %1578 = vmatprep.subr.mxu0 0.0
    %1579 = vmatpush1.msra.mxu0 0.0
    %1580 = vmatprep.subr.mxu0 0.0
    %1581 = vmatpush1.msra.mxu0 0.0
    %1582 = vmatprep.subr.mxu0 0.0
    %1583 = vmatpush1.msra.mxu0 0.0
    %1584 = vmatprep.subr.mxu0 0.0
    %1585 = vmatpush1.msra.mxu0 0.0
    %1586 = vmatprep.subr.mxu0 0.0
    %1587 = vmatpush1.msra.mxu0 0.0
    %1588 = vmatprep.subr.mxu0 0.0
    %1589 = vmatpush1.msra.mxu0 0.0
    %1590 = vmatprep.subr.mxu0 0.0
    %1591 = vmatpush1.msra.mxu0 0.0
    %1592 = vmatprep.subr.mxu0 0.0
    %1593 = vmatpush1.msra.mxu0 0.0
    %1594 = vmatprep.subr.mxu0 0.0
    %1595 = vmatpush1.msra.mxu0 0.0
    %1596 = vmatprep.subr.mxu0 0.0
    %1597 = vmatpush1.msra.mxu0 0.0
    %1598 = vmatprep.subr.mxu0 0.0
    %1599 = vmatpush1.msra.mxu0 0.0
    %1600 = vmatprep.subr.mxu0 0.0
    %1601 = vmatpush1.msra.mxu0 0.0
    %1602 = vmatprep.subr.mxu0 0.0
    %1603 = vmatpush1.msra.mxu0 0.0
    %1604 = vmatprep.subr.mxu0 0.0
    %1605 = vmatpush1.msra.mxu0 0.0
    %1606 = vmatprep.subr.mxu0 0.0
    %1607 = vmatpush1.msra.mxu0 0.0
    %1608 = vmatprep.subr.mxu0 0.0
    %1609 = vmatpush1.msra.mxu0 0.0
    %1610 = vmatprep.subr.mxu0 0.0
    %1611 = vmatpush1.msra.mxu0 0.0
    %1612 = vmatprep.subr.mxu0 0.0
    %1613 = vmatpush1.msra.mxu0 0.0
    %1614 = vmatprep.subr.mxu0 0.0
    %1615 = vmatpush1.msra.mxu0 0.0
    %1616 = vmatprep.subr.mxu0 0.0
    %1617 = vmatpush1.msra.mxu0 0.0
    %1618 = vmatprep.subr.mxu0 0.0
    %1619 = vmatpush1.msra.mxu0 0.0
    %1620 = vmatprep.subr.mxu0 0.0
    %1621 = vmatpush1.msra.mxu0 0.0
    %1622 = vmatprep.subr.mxu0 0.0
    %1623 = vmatpush1.msra.mxu0 0.0
    %1624 = vmatprep.subr.mxu0 0.0
    %1625 = vmatpush1.msra.mxu0 0.0
    %1626 = vmatprep.mubr.f32.mxu0 0.0
    %v1627 = vand.u32 %v1406, 4294901760
    %v1628 = vsub.f32 %v1406, %v1627
    %1629 = vmatmul.mubr.f32.gmra.mrb[0].mxu0 %v1628
    %v1630 = vpop.f32.mrb[0].mxu0
    %v1631 = vadd.f32 %v1557, %v1630
    %v1632 = vpop.f32.mrb[0].mxu0
    %1633 = vdwg.mxu0
    %1634 = vmatprep.subr.mxu0 0.0
    %v1635 = vand.u32 %v23, 4294901760
    %1636 = vmatpush1.msra.mxu0 %v1635
    %1637 = vmatprep.subr.mxu0 0.0
    %1638 = vmatpush1.msra.mxu0 0.0
    %1639 = vmatprep.subr.mxu0 0.0
    %1640 = vmatpush1.msra.mxu0 0.0
    %1641 = vmatprep.subr.mxu0 0.0
    %1642 = vmatpush1.msra.mxu0 0.0
    %1643 = vmatprep.subr.mxu0 0.0
    %1644 = vmatpush1.msra.mxu0 0.0
    %1645 = vmatprep.subr.mxu0 0.0
    %1646 = vmatpush1.msra.mxu0 0.0
    %1647 = vmatprep.subr.mxu0 0.0
    %1648 = vmatpush1.msra.mxu0 0.0
    %1649 = vmatprep.subr.mxu0 0.0
    %1650 = vmatpush1.msra.mxu0 0.0
    %1651 = vmatprep.subr.mxu0 0.0
    %1652 = vmatpush1.msra.mxu0 0.0
    %1653 = vmatprep.subr.mxu0 0.0
    %1654 = vmatpush1.msra.mxu0 0.0
    %1655 = vmatprep.subr.mxu0 0.0
    %1656 = vmatpush1.msra.mxu0 0.0
    %1657 = vmatprep.subr.mxu0 0.0
    %1658 = vmatpush1.msra.mxu0 0.0
    %1659 = vmatprep.subr.mxu0 0.0
    %1660 = vmatpush1.msra.mxu0 0.0
    %1661 = vmatprep.subr.mxu0 0.0
    %1662 = vmatpush1.msra.mxu0 0.0
    %1663 = vmatprep.subr.mxu0 0.0
    %1664 = vmatpush1.msra.mxu0 0.0
    %1665 = vmatprep.subr.mxu0 0.0
    %1666 = vmatpush1.msra.mxu0 0.0
    %1667 = vmatprep.subr.mxu0 0.0
    %1668 = vmatpush1.msra.mxu0 0.0
    %1669 = vmatprep.subr.mxu0 0.0
    %1670 = vmatpush1.msra.mxu0 0.0
    %1671 = vmatprep.subr.mxu0 0.0
    %1672 = vmatpush1.msra.mxu0 0.0
    %1673 = vmatprep.subr.mxu0 0.0
    %1674 = vmatpush1.msra.mxu0 0.0
    %1675 = vmatprep.subr.mxu0 0.0
    %1676 = vmatpush1.msra.mxu0 0.0
    %1677 = vmatprep.subr.mxu0 0.0
    %1678 = vmatpush1.msra.mxu0 0.0
    %1679 = vmatprep.subr.mxu0 0.0
    %1680 = vmatpush1.msra.mxu0 0.0
    %1681 = vmatprep.subr.mxu0 0.0
    %1682 = vmatpush1.msra.mxu0 0.0
    %1683 = vmatprep.subr.mxu0 0.0
    %1684 = vmatpush1.msra.mxu0 0.0
    %1685 = vmatprep.subr.mxu0 0.0
    %1686 = vmatpush1.msra.mxu0 0.0
    %1687 = vmatprep.subr.mxu0 0.0
    %1688 = vmatpush1.msra.mxu0 0.0
    %1689 = vmatprep.subr.mxu0 0.0
    %1690 = vmatpush1.msra.mxu0 0.0
    %1691 = vmatprep.subr.mxu0 0.0
    %1692 = vmatpush1.msra.mxu0 0.0
    %1693 = vmatprep.subr.mxu0 0.0
    %1694 = vmatpush1.msra.mxu0 0.0
    %1695 = vmatprep.subr.mxu0 0.0
    %1696 = vmatpush1.msra.mxu0 0.0
    %1697 = vmatprep.subr.mxu0 0.0
    %1698 = vmatpush1.msra.mxu0 0.0
    %1699 = vmatprep.mubr.f32.mxu0 0.0
    %v1700 = vand.u32 %v1406, 4294901760
    %v1701 = vsub.f32 %v1406, %v1700
    %v1702 = vand.u32 %v1701, 4294901760
    %1703 = vmatmul.mubr.f32.gmra.mrb[0].mxu0 %v1702
    %v1704 = vpop.f32.mrb[0].mxu0
    %v1705 = vadd.f32 %v1631, %v1704
    %v1706 = vpop.f32.mrb[0].mxu0
    %1707 = vdwg.mxu0
    %1708 = vmatprep.subr.mxu0 0.0
    %v1709 = vand.u32 %v23, 4294901760
    %v1710 = vsub.f32 %v23, %v1709
    %v1711 = vand.u32 %v1710, 4294901760
    %1712 = vmatpush1.msra.mxu0 %v1711
    %1713 = vmatprep.subr.mxu0 0.0
    %1714 = vmatpush1.msra.mxu0 0.0
    %1715 = vmatprep.subr.mxu0 0.0
    %1716 = vmatpush1.msra.mxu0 0.0
    %1717 = vmatprep.subr.mxu0 0.0
    %1718 = vmatpush1.msra.mxu0 0.0
    %1719 = vmatprep.subr.mxu0 0.0
    %1720 = vmatpush1.msra.mxu0 0.0
    %1721 = vmatprep.subr.mxu0 0.0
    %1722 = vmatpush1.msra.mxu0 0.0
    %1723 = vmatprep.subr.mxu0 0.0
    %1724 = vmatpush1.msra.mxu0 0.0
    %1725 = vmatprep.subr.mxu0 0.0
    %1726 = vmatpush1.msra.mxu0 0.0
    %1727 = vmatprep.subr.mxu0 0.0
    %1728 = vmatpush1.msra.mxu0 0.0
    %1729 = vmatprep.subr.mxu0 0.0
    %1730 = vmatpush1.msra.mxu0 0.0
    %1731 = vmatprep.subr.mxu0 0.0
    %1732 = vmatpush1.msra.mxu0 0.0
    %1733 = vmatprep.subr.mxu0 0.0
    %1734 = vmatpush1.msra.mxu0 0.0
    %1735 = vmatprep.subr.mxu0 0.0
    %1736 = vmatpush1.msra.mxu0 0.0
    %1737 = vmatprep.subr.mxu0 0.0
    %1738 = vmatpush1.msra.mxu0 0.0
    %1739 = vmatprep.subr.mxu0 0.0
    %1740 = vmatpush1.msra.mxu0 0.0
    %1741 = vmatprep.subr.mxu0 0.0
    %1742 = vmatpush1.msra.mxu0 0.0
    %1743 = vmatprep.subr.mxu0 0.0
    %1744 = vmatpush1.msra.mxu0 0.0
    %1745 = vmatprep.subr.mxu0 0.0
    %1746 = vmatpush1.msra.mxu0 0.0
    %1747 = vmatprep.subr.mxu0 0.0
    %1748 = vmatpush1.msra.mxu0 0.0
    %1749 = vmatprep.subr.mxu0 0.0
    %1750 = vmatpush1.msra.mxu0 0.0
    %1751 = vmatprep.subr.mxu0 0.0
    %1752 = vmatpush1.msra.mxu0 0.0
    %1753 = vmatprep.subr.mxu0 0.0
    %1754 = vmatpush1.msra.mxu0 0.0
    %1755 = vmatprep.subr.mxu0 0.0
    %1756 = vmatpush1.msra.mxu0 0.0
    %1757 = vmatprep.subr.mxu0 0.0
    %1758 = vmatpush1.msra.mxu0 0.0
    %1759 = vmatprep.subr.mxu0 0.0
    %1760 = vmatpush1.msra.mxu0 0.0
    %1761 = vmatprep.subr.mxu0 0.0
    %1762 = vmatpush1.msra.mxu0 0.0
    %1763 = vmatprep.subr.mxu0 0.0
    %1764 = vmatpush1.msra.mxu0 0.0
    %1765 = vmatprep.subr.mxu0 0.0
    %1766 = vmatpush1.msra.mxu0 0.0
    %1767 = vmatprep.subr.mxu0 0.0
    %1768 = vmatpush1.msra.mxu0 0.0
    %1769 = vmatprep.subr.mxu0 0.0
    %1770 = vmatpush1.msra.mxu0 0.0
    %1771 = vmatprep.subr.mxu0 0.0
    %1772 = vmatpush1.msra.mxu0 0.0
    %1773 = vmatprep.subr.mxu0 0.0
    %1774 = vmatpush1.msra.mxu0 0.0
    %1775 = vmatprep.mubr.f32.mxu0 0.0
    %v1776 = vand.u32 %v1406, 4294901760
    %1777 = vmatmul.mubr.f32.gmra.mrb[0].mxu0 %v1776
    %v1778 = vpop.f32.mrb[0].mxu0
    %v1779 = vadd.f32 %v1705, %v1778
    %v1780 = vpop.f32.mrb[0].mxu0
    %1781 = vdwg.mxu0
    %1782 = vmatprep.subr.mxu0 0.0
    %v1783 = vand.u32 %v23, 4294901760
    %1784 = vmatpush1.msra.mxu0 %v1783
    %1785 = vmatprep.subr.mxu0 0.0
    %1786 = vmatpush1.msra.mxu0 0.0
    %1787 = vmatprep.subr.mxu0 0.0
    %1788 = vmatpush1.msra.mxu0 0.0
    %1789 = vmatprep.subr.mxu0 0.0
    %1790 = vmatpush1.msra.mxu0 0.0
    %1791 = vmatprep.subr.mxu0 0.0
    %1792 = vmatpush1.msra.mxu0 0.0
    %1793 = vmatprep.subr.mxu0 0.0
    %1794 = vmatpush1.msra.mxu0 0.0
    %1795 = vmatprep.subr.mxu0 0.0
    %1796 = vmatpush1.msra.mxu0 0.0
    %1797 = vmatprep.subr.mxu0 0.0
    %1798 = vmatpush1.msra.mxu0 0.0
    %1799 = vmatprep.subr.mxu0 0.0
    %1800 = vmatpush1.msra.mxu0 0.0
    %1801 = vmatprep.subr.mxu0 0.0
    %1802 = vmatpush1.msra.mxu0 0.0
    %1803 = vmatprep.subr.mxu0 0.0
    %1804 = vmatpush1.msra.mxu0 0.0
    %1805 = vmatprep.subr.mxu0 0.0
    %1806 = vmatpush1.msra.mxu0 0.0
    %1807 = vmatprep.subr.mxu0 0.0
    %1808 = vmatpush1.msra.mxu0 0.0
    %1809 = vmatprep.subr.mxu0 0.0
    %1810 = vmatpush1.msra.mxu0 0.0
    %1811 = vmatprep.subr.mxu0 0.0
    %1812 = vmatpush1.msra.mxu0 0.0
    %1813 = vmatprep.subr.mxu0 0.0
    %1814 = vmatpush1.msra.mxu0 0.0
    %1815 = vmatprep.subr.mxu0 0.0
    %1816 = vmatpush1.msra.mxu0 0.0
    %1817 = vmatprep.subr.mxu0 0.0
    %1818 = vmatpush1.msra.mxu0 0.0
    %1819 = vmatprep.subr.mxu0 0.0
    %1820 = vmatpush1.msra.mxu0 0.0
    %1821 = vmatprep.subr.mxu0 0.0
    %1822 = vmatpush1.msra.mxu0 0.0
    %1823 = vmatprep.subr.mxu0 0.0
    %1824 = vmatpush1.msra.mxu0 0.0
    %1825 = vmatprep.subr.mxu0 0.0
    %1826 = vmatpush1.msra.mxu0 0.0
    %1827 = vmatprep.subr.mxu0 0.0
    %1828 = vmatpush1.msra.mxu0 0.0
    %1829 = vmatprep.subr.mxu0 0.0
    %1830 = vmatpush1.msra.mxu0 0.0
    %1831 = vmatprep.subr.mxu0 0.0
    %1832 = vmatpush1.msra.mxu0 0.0
    %1833 = vmatprep.subr.mxu0 0.0
    %1834 = vmatpush1.msra.mxu0 0.0
    %1835 = vmatprep.subr.mxu0 0.0
    %1836 = vmatpush1.msra.mxu0 0.0
    %1837 = vmatprep.subr.mxu0 0.0
    %1838 = vmatpush1.msra.mxu0 0.0
    %1839 = vmatprep.subr.mxu0 0.0
    %1840 = vmatpush1.msra.mxu0 0.0
    %1841 = vmatprep.subr.mxu0 0.0
    %1842 = vmatpush1.msra.mxu0 0.0
    %1843 = vmatprep.subr.mxu0 0.0
    %1844 = vmatpush1.msra.mxu0 0.0
    %1845 = vmatprep.subr.mxu0 0.0
    %1846 = vmatpush1.msra.mxu0 0.0
    %1847 = vmatprep.mubr.f32.mxu0 0.0
    %v1848 = vand.u32 %v1406, 4294901760
    %1849 = vmatmul.mubr.f32.gmra.mrb[0].mxu0 %v1848
    %v1850 = vpop.f32.mrb[0].mxu0
    %v1851 = vadd.f32 %v1779, %v1850
    %v1852 = vpop.f32.mrb[0].mxu0
    %1853 = vdwg.mxu0
    %1854 = vst.msk [vmem:[#allocation2] sm:$0xff] %vm24, %v1402
    %1855 = vst.msk [vmem:[#allocation2 + $0x8] sm:$0xff] %vm24, %v1851
    // Predicated region
    $region14: #{_general_attention_impl.1} parent=1 // pred_check
      _
    $region15: #{_general_attention_impl.1} parent=1 // pred_check_branch
      %1857 = sbr.rel (0) target = $region17
    $region16: #{_general_attention_impl.1} parent=1 // pred_region
      %s1859 = ssub.s32 256, 256
      %1860 = vsyncadd [#allocation3], %s1859
      %s1861 = sshll.u32 [#allocation2], 4
      %s1862 = int_to_ptr.vmem [resolvable:$true] %s1861
      %1867 = dma.vmem_to_hbm [thread:$0]  %s1862, 256, %s3, [#allocation3], 128, 128, 8
    $region17: #{_general_attention_impl.1} parent=1 // pred_fallthru
      _
    // Predicated region
    $region18: #{_general_attention_impl.1} parent=1 // pred_check
      _
    $region19: #{_general_attention_impl.1} parent=1 // pred_check_branch
      %1869 = sbr.rel (0) target = $region21
    $region20: #{_general_attention_impl.1} parent=1 // pred_region
      %s1871 = ssub.s32 256, 256
      %1872 = vsyncadd [#allocation5], %s1871
      %s1873 = sshll.u32 [#allocation4], 4
      %s1874 = int_to_ptr.vmem [resolvable:$true] %s1873
      %1879 = dma.vmem_to_hbm [thread:$0]  %s1874, 256, %s4, [#allocation5], 128, 128, 8
    $region21: #{_general_attention_impl.1} parent=1 // pred_fallthru
      _
    // Predicated region
    $region22: #{_general_attention_impl.1} parent=1 // pred_check
      _
    $region23: #{_general_attention_impl.1} parent=1 // pred_check_branch
      %1881 = sbr.rel (0) target = $region25
    $region24: #{_general_attention_impl.1} parent=1 // pred_region
      %1882 = dma.done [#allocation3], 256
    $region25: #{_general_attention_impl.1} parent=1 // pred_fallthru
      _
    // Predicated region
    $region26: #{_general_attention_impl.1} parent=1 // pred_check
      _
    $region27: #{_general_attention_impl.1} parent=1 // pred_check_branch
      %1884 = sbr.rel (0) target = $region29
    $region28: #{_general_attention_impl.1} parent=1 // pred_region
      %1885 = dma.done [#allocation5], 256
    $region29: #{_general_attention_impl.1} parent=1 // pred_fallthru
      _
    %1886 = vsyncpa [#allocation3], 1
    %1887 = vsyncpa [#allocation5], 1

</llo_original>
